<compile_context>
chip_gen: v5e
topology: v5e:2x2
jax: 0.10.0
libtpu: 0.0.40
codegen_flags: <defaults>
</compile_context>

<pallas_src>
import numpy as np
import jax
import jax.numpy as jnp
from jax.experimental import pallas as pl
from jax.experimental.pallas import tpu as pltpu


# ----------------------------------------------------------------------------
# Fused Pallas kernel
# ----------------------------------------------------------------------------
def fused_forward_kernel(
    p0_ref, w0_ref, b0_ref, wa0_ref,          # block 0 (patches already im2col'd)
    s1_ref, wc1_ref, b1_ref, wa1_ref,         # block 1
    s2_ref, wc2_ref, b2_ref, wa2_ref,         # block 2
    s3_ref, wc3_ref, b3_ref, wa3_ref,         # block 3
    ba_ref,                                   # SMEM (4,) attention biases
    wn_ref, nz_ref,                           # NoiseLayer weight / fixed noise sample
    w1h_ref, b1h_ref,                         # fused [value | advantage] first layer (F, 256)
    w2h_ref, b2h_ref,                         # fused block-diag second layer (256, 1+A)
    o_ref,
):
    def attention_gate(y, wa, ba):
        # 1x1 conv -> lane reduction on the VPU/XLU, sigmoid via EUP reciprocal
        logit = jnp.sum(y * wa, axis=-1, keepdims=True) + ba
        att = pl.reciprocal(1.0 + jnp.exp(-logit), approx=True)
        return y + y * att                    # x + x * attention

    # --- block 0: im2col was done on the host -> one bf16 MXU matmul ---------
    y = jnp.dot(p0_ref[...], w0_ref[...], preferred_element_type=jnp.float32)
    y = jnp.maximum(y + b0_ref[...], 0.0)
    x = attention_gate(y, wa0_ref[...], ba_ref[0])

    # --- blocks 1..3: 1 wide tap matmul + 9 gather matmuls per block ---------
    def conv_attention_block(x, s_ref, wcat_ref, b_ref, wa_ref, ba):
        n_out = s_ref.shape[1]
        cout = b_ref.shape[1]
        # t[:, k*Cout + co] = sum_ci x[:, ci] * W_k[ci, co]  (lane-dense output)
        t = jnp.dot(x.astype(jnp.bfloat16), wcat_ref[...],
                    preferred_element_type=jnp.float32)
        t = t.astype(jnp.bfloat16)
        acc = jnp.zeros((n_out, cout), jnp.float32)
        for k in range(9):                    # static unroll: 3x3 taps
            acc = acc + jnp.dot(s_ref[k], t[:, k * cout:(k + 1) * cout],
                                preferred_element_type=jnp.float32)
        y = jnp.maximum(acc + b_ref[...], 0.0)
        return attention_gate(y, wa_ref[...], ba)

    x = conv_attention_block(x, s1_ref, wc1_ref, b1_ref, wa1_ref, ba_ref[1])
    x = conv_attention_block(x, s2_ref, wc2_ref, b2_ref, wa2_ref, ba_ref[2])
    x = conv_attention_block(x, s3_ref, wc3_ref, b3_ref, wa3_ref, ba_ref[3])

    # final feature map is 1x1 -> rows are exactly the batch dimension, so the
    # NCHW flatten is the identity here.
    feats = x + wn_ref[...] * nz_ref[...]     # NoiseLayer (f32)

    h = jnp.dot(feats.astype(jnp.bfloat16), w1h_ref[...],
                preferred_element_type=jnp.float32) + b1h_ref[...]
    h = jnp.maximum(h, 0.0)                   # (B, 256) = [value | advantage]
    out = jnp.dot(h.astype(jnp.bfloat16), w2h_ref[...],
                  preferred_element_type=jnp.float32) + b2h_ref[...]
    v = out[:, :1]                            # (B, 1)
    adv = out[:, 1:]                          # (B, A)
    # PyTorch spec: advantage.mean() is a GLOBAL mean (over batch AND actions)
    o_ref[...] = v + adv - jnp.mean(adv)


# ----------------------------------------------------------------------------
# Host-side constants: per-block 0/1 selection matrices implementing the
# 3x3 / stride 2 / pad 1 gather (block-diagonal over batch) for blocks 1..3.
# ----------------------------------------------------------------------------
def build_selection_matrices(batch, h, w):
    ho = (h + 2 - 3) // 2 + 1
    wo = (w + 2 - 3) // 2 + 1
    n_out = batch * ho * wo
    n_in = batch * h * w
    s = np.zeros((9, n_out, n_in), dtype=np.float32)
    for bb in range(batch):
        for oy in range(ho):
            for ox in range(wo):
                r = bb * ho * wo + oy * wo + ox
                for ky in range(3):
                    for kx in range(3):
                        iy = 2 * oy + ky - 1
                        ix = 2 * ox + kx - 1
                        if 0 <= iy < h and 0 <= ix < w:
                            s[ky * 3 + kx, r, bb * h * w + iy * w + ix] = 1.0
    return s, ho, wo


def im2col_block0(x_nhwc):
    """Host-side im2col for conv 3x3 / stride 2 / pad 1 -> (B*Ho*Wo, 9*C)."""
    b, h, w, c = x_nhwc.shape
    ho = (h + 2 - 3) // 2 + 1
    wo = (w + 2 - 3) // 2 + 1
    xp = jnp.pad(x_nhwc, ((0, 0), (1, 1), (1, 1), (0, 0)))
    taps = []
    for ky in range(3):
        for kx in range(3):
            taps.append(xp[:, ky:ky + 2 * ho:2, kx:kx + 2 * wo:2, :])  # (B,Ho,Wo,C)
    p = jnp.stack(taps, axis=3)                      # (B, Ho, Wo, 9, C)
    return p.reshape(b * ho * wo, 9 * c), ho, wo     # columns ordered (k, ci)


# ----------------------------------------------------------------------------
# Deterministic parameter initialization (mirrors the PyTorch module)
# ----------------------------------------------------------------------------
def uniform(key, shape, bound):
    return jax.random.uniform(key, shape, jnp.float32, -bound, bound)


def xavier_uniform(key, shape, fan_in, fan_out, gain=1.0):
    bound = gain * (6.0 / (fan_in + fan_out)) ** 0.5
    return uniform(key, shape, bound)


def init_params(key, batch, in_channels, in_h, in_w, outputs_count):
    chans = [in_channels, 32, 32, 64, 64]
    params = {"blocks": []}
    ba_list = []
    h, w = in_h, in_w
    for i in range(4):
        cin, cout = chans[i], chans[i + 1]
        key, k1, k2, k3, k4 = jax.random.split(key, 5)
        # conv weight, PyTorch layout (Cout, Cin, 3, 3), xavier_uniform gain=1
        wt = xavier_uniform(k1, (cout, cin, 3, 3), cin * 9, cout * 9, gain=1.0)
        w_taps = jnp.transpose(wt, (2, 3, 1, 0)).reshape(9, cin, cout)  # (k, Cin, Cout)
        b = uniform(k2, (1, cout), 1.0 / (cin * 9) ** 0.5)
        # attention 1x1 conv weight (1, Cout, 1, 1): xavier gain = 0.01 / Cout
        wa = xavier_uniform(k3, (1, cout), cout, 1, gain=0.01 / cout)
        ba = uniform(k4, (1,), 1.0 / cout ** 0.5)

        ho = (h + 2 - 3) // 2 + 1
        wo = (w + 2 - 3) // 2 + 1
        blk = {"b": b, "wa": wa}
        if i == 0:
            # block 0: patches come im2col'd from the wrapper, weight is (9*Cin, Cout)
            blk["w"] = w_taps.reshape(9 * cin, cout).astype(jnp.bfloat16)
        else:
            s_np, _, _ = build_selection_matrices(batch, h, w)
            blk["s"] = jnp.asarray(s_np, jnp.bfloat16)                   # 0/1 exact in bf16
            # W_all: (Cin, 9*Cout), column index = k*Cout + co
            blk["w"] = jnp.transpose(w_taps, (1, 0, 2)).reshape(cin, 9 * cout).astype(jnp.bfloat16)
        params["blocks"].append(blk)
        ba_list.append(ba)
        h, w = ho, wo
    params["ba"] = jnp.concatenate(ba_list)                 # (4,) -> SMEM scalars

    fc_inputs = h * w * chans[-1]
    # TODO(synk): fused flatten assumes the final feature map is 1x1 (H, W multiples
    # of 16 with exactly 16x downsampling); larger maps need an NCHW-ordered flatten.
    assert h == 1 and w == 1, "fused flatten only implemented for 1x1 final feature maps"

    key, kn, knz = jax.random.split(key, 3)
    params["noise_w"] = 0.001 * jax.random.uniform(kn, (1, fc_inputs), jnp.float32)
    # TODO(synk): PyTorch samples fresh N(0,1) noise each forward; a fixed sample is
    # used here (could be generated in-kernel with pltpu.prng_seed/prng_random_bits).
    params["noise"] = jax.random.normal(knz, (1, fc_inputs), jnp.float32)

    def linear(k, fin, fout):
        k1, k2 = jax.random.split(k)
        bound = 1.0 / fin ** 0.5
        return uniform(k1, (fin, fout), bound), uniform(k2, (1, fout), bound)

    key, kv1, kv2, ka1, ka2 = jax.random.split(key, 5)
    w1v, b1v = linear(kv1, fc_inputs, 128)
    w2v, b2v = linear(kv2, 128, 1)
    w1a, b1a = linear(ka1, fc_inputs, 128)
    w2a, b2a = linear(ka2, 128, outputs_count)
    # fuse the two first-layer head weights into one lane-dense (F, 256) matmul
    params["w1h"] = jnp.concatenate([w1v, w1a], axis=1).astype(jnp.bfloat16)
    params["b1h"] = jnp.concatenate([b1v, b1a], axis=1)
    # fuse the two second-layer heads into one block-diagonal (256, 1+A) matmul
    w2 = jnp.zeros((256, 1 + outputs_count), jnp.float32)
    w2 = w2.at[:128, :1].set(w2v)
    w2 = w2.at[128:, 1:].set(w2a)
    params["w2h"] = w2.astype(jnp.bfloat16)
    params["b2h"] = jnp.concatenate([b2v, b2a], axis=1)     # (1, 1+A)
    return params


# ----------------------------------------------------------------------------
# Forward pass: a single pallas_call
# ----------------------------------------------------------------------------
def model_forward(params, state_nchw):
    b, c, h, w = state_nchw.shape
    a = params["b2h"].shape[1] - 1

    # channels-last + host-side im2col for block 0 (one bf16 patch matrix)
    x_nhwc = jnp.transpose(state_nchw, (0, 2, 3, 1)).astype(jnp.float32)
    p0, _, _ = im2col_block0(x_nhwc)
    p0 = p0.astype(jnp.bfloat16)

    blk = params["blocks"]
    inputs = [p0, blk[0]["w"], blk[0]["b"], blk[0]["wa"]]
    for i in (1, 2, 3):
        inputs += [blk[i]["s"], blk[i]["w"], blk[i]["b"], blk[i]["wa"]]
    inputs += [params["ba"], params["noise_w"], params["noise"],
               params["w1h"], params["b1h"], params["w2h"], params["b2h"]]

    def _vmem():
        return pl.BlockSpec(memory_space=pltpu.MemorySpace.VMEM)

    in_specs = ([_vmem() for _ in range(16)]
                + [pl.BlockSpec(memory_space=pltpu.MemorySpace.SMEM)]
                + [_vmem() for _ in range(6)])

    return pl.pallas_call(
        fused_forward_kernel,
        out_shape=jax.ShapeDtypeStruct((b, a), jnp.float32),
        in_specs=in_specs,
        out_specs=pl.BlockSpec(memory_space=pltpu.MemorySpace.VMEM),
        compiler_params=pltpu.CompilerParams(vmem_limit_bytes=32 * 1024 * 1024),
    )(*inputs)


# ----------------------------------------------------------------------------
if __name__ == "__main__":
    key = jax.random.PRNGKey(0)

    # small shapes consistent with the module: input_shape=(C,H,W)=(4,16,16)
    B, C, H, W = 2, 4, 16, 16
    outputs_count = 6

    kparam, kinput = jax.random.split(key)
    params = init_params(kparam, B, C, H, W, outputs_count)
    state = jax.random.normal(kinput, (B, C, H, W), jnp.float32)

    out = model_forward(params, state)
    out = jax.block_until_ready(out)
    assert out.shape == (B, outputs_count)
    assert bool(jnp.all(jnp.isfinite(out)))
    print("KERNEL_OK")
</pallas_src>

<mosaic_0001>
module attributes {stable_mosaic.version = 11 : i64} {
  func.func @fused_forward_kernel(%arg0: memref<128x36xbf16, #tpu.memory_space<vmem>>, %arg1: memref<36x32xbf16, #tpu.memory_space<vmem>>, %arg2: memref<1x32xf32, #tpu.memory_space<vmem>>, %arg3: memref<1x32xf32, #tpu.memory_space<vmem>>, %arg4: memref<9x32x128xbf16, #tpu.memory_space<vmem>>, %arg5: memref<32x288xbf16, #tpu.memory_space<vmem>>, %arg6: memref<1x32xf32, #tpu.memory_space<vmem>>, %arg7: memref<1x32xf32, #tpu.memory_space<vmem>>, %arg8: memref<9x8x32xbf16, #tpu.memory_space<vmem>>, %arg9: memref<32x576xbf16, #tpu.memory_space<vmem>>, %arg10: memref<1x64xf32, #tpu.memory_space<vmem>>, %arg11: memref<1x64xf32, #tpu.memory_space<vmem>>, %arg12: memref<9x2x8xbf16, #tpu.memory_space<vmem>>, %arg13: memref<64x576xbf16, #tpu.memory_space<vmem>>, %arg14: memref<1x64xf32, #tpu.memory_space<vmem>>, %arg15: memref<1x64xf32, #tpu.memory_space<vmem>>, %arg16: memref<4xf32, #tpu.memory_space<smem>>, %arg17: memref<1x64xf32, #tpu.memory_space<vmem>>, %arg18: memref<1x64xf32, #tpu.memory_space<vmem>>, %arg19: memref<64x256xbf16, #tpu.memory_space<vmem>>, %arg20: memref<1x256xf32, #tpu.memory_space<vmem>>, %arg21: memref<256x7xbf16, #tpu.memory_space<vmem>>, %arg22: memref<1x7xf32, #tpu.memory_space<vmem>>, %arg23: memref<2x6xf32, #tpu.memory_space<vmem>>) attributes {dimension_semantics = [], scalar_prefetch = 0 : i64, scratch_operands = 0 : i64, tpu.core_type = #tpu.core_type<tc>} {
    %c0 = arith.constant 0 : index
    %c0_0 = arith.constant 0 : index
    %0 = vector.load %arg0[%c0, %c0_0] : memref<128x36xbf16, #tpu.memory_space<vmem>>, vector<128x36xbf16>
    %c0_1 = arith.constant 0 : index
    %c0_2 = arith.constant 0 : index
    %1 = vector.load %arg1[%c0_1, %c0_2] : memref<36x32xbf16, #tpu.memory_space<vmem>>, vector<36x32xbf16>
    %cst = arith.constant dense<0.000000e+00> : vector<128x32xf32>
    %2 = tpu.matmul %0, %1, %cst {dimension_numbers = #tpu.dot_dimension_numbers<[1], [0], [0], [1], [0, 0, 1, 1], [], []>} : vector<128x36xbf16>, vector<36x32xbf16>, vector<128x32xf32> -> vector<128x32xf32>
    %c0_3 = arith.constant 0 : index
    %c0_4 = arith.constant 0 : index
    %3 = vector.load %arg2[%c0_3, %c0_4] : memref<1x32xf32, #tpu.memory_space<vmem>>, vector<1x32xf32>
    %4 = vector.broadcast %3 : vector<1x32xf32> to vector<128x32xf32>
    %5 = arith.addf %2, %4 : vector<128x32xf32>
    %cst_5 = arith.constant 0.000000e+00 : f32
    %6 = vector.broadcast %cst_5 : f32 to vector<128x32xf32>
    %7 = arith.maximumf %5, %6 : vector<128x32xf32>
    %c0_6 = arith.constant 0 : index
    %c0_7 = arith.constant 0 : index
    %8 = vector.load %arg3[%c0_6, %c0_7] : memref<1x32xf32, #tpu.memory_space<vmem>>, vector<1x32xf32>
    %c0_8 = arith.constant 0 : index
    %9 = memref.load %arg16[%c0_8] : memref<4xf32, #tpu.memory_space<smem>>
    %10 = vector.broadcast %8 : vector<1x32xf32> to vector<128x32xf32>
    %11 = arith.mulf %7, %10 : vector<128x32xf32>
    %cst_9 = arith.constant dense<0.000000e+00> : vector<128xf32>
    %12 = vector.multi_reduction <add>, %11, %cst_9 [1] : vector<128x32xf32> to vector<128xf32>
    %13 = vector.shape_cast %12 : vector<128xf32> to vector<128x1xf32>
    %14 = vector.broadcast %9 : f32 to vector<128x1xf32>
    %15 = arith.addf %13, %14 : vector<128x1xf32>
    %cst_10 = arith.constant 0.000000e+00 : f32
    %16 = vector.broadcast %cst_10 : f32 to vector<128x1xf32>
    %17 = arith.subf %16, %15 : vector<128x1xf32>
    %18 = math.exp %17 : vector<128x1xf32>
    %cst_11 = arith.constant 1.000000e+00 : f32
    %19 = vector.broadcast %cst_11 : f32 to vector<128x1xf32>
    %20 = arith.addf %19, %18 : vector<128x1xf32>
    %21 = tpu.reciprocal %20 {approx = true} : vector<128x1xf32> -> vector<128x1xf32>
    %22 = vector.broadcast %21 : vector<128x1xf32> to vector<128x32xf32>
    %23 = arith.mulf %7, %22 : vector<128x32xf32>
    %24 = arith.addf %7, %23 : vector<128x32xf32>
    %c1 = arith.constant 1 : index
    %25 = memref.load %arg16[%c1] : memref<4xf32, #tpu.memory_space<smem>>
    %26 = arith.truncf %24 : vector<128x32xf32> to vector<128x32xbf16>
    %c0_12 = arith.constant 0 : index
    %c0_13 = arith.constant 0 : index
    %27 = vector.load %arg5[%c0_12, %c0_13] : memref<32x288xbf16, #tpu.memory_space<vmem>>, vector<32x288xbf16>
    %cst_14 = arith.constant dense<0.000000e+00> : vector<128x288xf32>
    %28 = tpu.matmul %26, %27, %cst_14 {dimension_numbers = #tpu.dot_dimension_numbers<[1], [0], [0], [1], [0, 0, 1, 1], [], []>} : vector<128x32xbf16>, vector<32x288xbf16>, vector<128x288xf32> -> vector<128x288xf32>
    %29 = arith.truncf %28 : vector<128x288xf32> to vector<128x288xbf16>
    %cst_15 = arith.constant 0.000000e+00 : f32
    %30 = vector.broadcast %cst_15 : f32 to vector<32x32xf32>
    %c0_16 = arith.constant 0 : index
    %c0_17 = arith.constant 0 : index
    %c0_18 = arith.constant 0 : index
    %31 = vector.load %arg4[%c0_16, %c0_17, %c0_18] : memref<9x32x128xbf16, #tpu.memory_space<vmem>>, vector<1x32x128xbf16>
    %32 = vector.shape_cast %31 : vector<1x32x128xbf16> to vector<32x128xbf16>
    %33 = vector.extract_strided_slice %29 {offsets = [0, 0], sizes = [128, 32], strides = [1, 1]} : vector<128x288xbf16> to vector<128x32xbf16>
    %cst_19 = arith.constant dense<0.000000e+00> : vector<32x32xf32>
    %34 = tpu.matmul %32, %33, %cst_19 {dimension_numbers = #tpu.dot_dimension_numbers<[1], [0], [0], [1], [0, 0, 1, 1], [], []>} : vector<32x128xbf16>, vector<128x32xbf16>, vector<32x32xf32> -> vector<32x32xf32>
    %35 = arith.addf %30, %34 : vector<32x32xf32>
    %c1_20 = arith.constant 1 : index
    %c0_21 = arith.constant 0 : index
    %c0_22 = arith.constant 0 : index
    %36 = vector.load %arg4[%c1_20, %c0_21, %c0_22] : memref<9x32x128xbf16, #tpu.memory_space<vmem>>, vector<1x32x128xbf16>
    %37 = vector.shape_cast %36 : vector<1x32x128xbf16> to vector<32x128xbf16>
    %38 = vector.extract_strided_slice %29 {offsets = [0, 32], sizes = [128, 32], strides = [1, 1]} : vector<128x288xbf16> to vector<128x32xbf16>
    %cst_23 = arith.constant dense<0.000000e+00> : vector<32x32xf32>
    %39 = tpu.matmul %37, %38, %cst_23 {dimension_numbers = #tpu.dot_dimension_numbers<[1], [0], [0], [1], [0, 0, 1, 1], [], []>} : vector<32x128xbf16>, vector<128x32xbf16>, vector<32x32xf32> -> vector<32x32xf32>
    %40 = arith.addf %35, %39 : vector<32x32xf32>
    %c2 = arith.constant 2 : index
    %c0_24 = arith.constant 0 : index
    %c0_25 = arith.constant 0 : index
    %41 = vector.load %arg4[%c2, %c0_24, %c0_25] : memref<9x32x128xbf16, #tpu.memory_space<vmem>>, vector<1x32x128xbf16>
    %42 = vector.shape_cast %41 : vector<1x32x128xbf16> to vector<32x128xbf16>
    %43 = vector.extract_strided_slice %29 {offsets = [0, 64], sizes = [128, 32], strides = [1, 1]} : vector<128x288xbf16> to vector<128x32xbf16>
    %cst_26 = arith.constant dense<0.000000e+00> : vector<32x32xf32>
    %44 = tpu.matmul %42, %43, %cst_26 {dimension_numbers = #tpu.dot_dimension_numbers<[1], [0], [0], [1], [0, 0, 1, 1], [], []>} : vector<32x128xbf16>, vector<128x32xbf16>, vector<32x32xf32> -> vector<32x32xf32>
    %45 = arith.addf %40, %44 : vector<32x32xf32>
    %c3 = arith.constant 3 : index
    %c0_27 = arith.constant 0 : index
    %c0_28 = arith.constant 0 : index
    %46 = vector.load %arg4[%c3, %c0_27, %c0_28] : memref<9x32x128xbf16, #tpu.memory_space<vmem>>, vector<1x32x128xbf16>
    %47 = vector.shape_cast %46 : vector<1x32x128xbf16> to vector<32x128xbf16>
    %48 = vector.extract_strided_slice %29 {offsets = [0, 96], sizes = [128, 32], strides = [1, 1]} : vector<128x288xbf16> to vector<128x32xbf16>
    %cst_29 = arith.constant dense<0.000000e+00> : vector<32x32xf32>
    %49 = tpu.matmul %47, %48, %cst_29 {dimension_numbers = #tpu.dot_dimension_numbers<[1], [0], [0], [1], [0, 0, 1, 1], [], []>} : vector<32x128xbf16>, vector<128x32xbf16>, vector<32x32xf32> -> vector<32x32xf32>
    %50 = arith.addf %45, %49 : vector<32x32xf32>
    %c4 = arith.constant 4 : index
    %c0_30 = arith.constant 0 : index
    %c0_31 = arith.constant 0 : index
    %51 = vector.load %arg4[%c4, %c0_30, %c0_31] : memref<9x32x128xbf16, #tpu.memory_space<vmem>>, vector<1x32x128xbf16>
    %52 = vector.shape_cast %51 : vector<1x32x128xbf16> to vector<32x128xbf16>
    %53 = vector.extract_strided_slice %29 {offsets = [0, 128], sizes = [128, 32], strides = [1, 1]} : vector<128x288xbf16> to vector<128x32xbf16>
    %cst_32 = arith.constant dense<0.000000e+00> : vector<32x32xf32>
    %54 = tpu.matmul %52, %53, %cst_32 {dimension_numbers = #tpu.dot_dimension_numbers<[1], [0], [0], [1], [0, 0, 1, 1], [], []>} : vector<32x128xbf16>, vector<128x32xbf16>, vector<32x32xf32> -> vector<32x32xf32>
    %55 = arith.addf %50, %54 : vector<32x32xf32>
    %c5 = arith.constant 5 : index
    %c0_33 = arith.constant 0 : index
    %c0_34 = arith.constant 0 : index
    %56 = vector.load %arg4[%c5, %c0_33, %c0_34] : memref<9x32x128xbf16, #tpu.memory_space<vmem>>, vector<1x32x128xbf16>
    %57 = vector.shape_cast %56 : vector<1x32x128xbf16> to vector<32x128xbf16>
    %58 = vector.extract_strided_slice %29 {offsets = [0, 160], sizes = [128, 32], strides = [1, 1]} : vector<128x288xbf16> to vector<128x32xbf16>
    %cst_35 = arith.constant dense<0.000000e+00> : vector<32x32xf32>
    %59 = tpu.matmul %57, %58, %cst_35 {dimension_numbers = #tpu.dot_dimension_numbers<[1], [0], [0], [1], [0, 0, 1, 1], [], []>} : vector<32x128xbf16>, vector<128x32xbf16>, vector<32x32xf32> -> vector<32x32xf32>
    %60 = arith.addf %55, %59 : vector<32x32xf32>
    %c6 = arith.constant 6 : index
    %c0_36 = arith.constant 0 : index
    %c0_37 = arith.constant 0 : index
    %61 = vector.load %arg4[%c6, %c0_36, %c0_37] : memref<9x32x128xbf16, #tpu.memory_space<vmem>>, vector<1x32x128xbf16>
    %62 = vector.shape_cast %61 : vector<1x32x128xbf16> to vector<32x128xbf16>
    %63 = vector.extract_strided_slice %29 {offsets = [0, 192], sizes = [128, 32], strides = [1, 1]} : vector<128x288xbf16> to vector<128x32xbf16>
    %cst_38 = arith.constant dense<0.000000e+00> : vector<32x32xf32>
    %64 = tpu.matmul %62, %63, %cst_38 {dimension_numbers = #tpu.dot_dimension_numbers<[1], [0], [0], [1], [0, 0, 1, 1], [], []>} : vector<32x128xbf16>, vector<128x32xbf16>, vector<32x32xf32> -> vector<32x32xf32>
    %65 = arith.addf %60, %64 : vector<32x32xf32>
    %c7 = arith.constant 7 : index
    %c0_39 = arith.constant 0 : index
    %c0_40 = arith.constant 0 : index
    %66 = vector.load %arg4[%c7, %c0_39, %c0_40] : memref<9x32x128xbf16, #tpu.memory_space<vmem>>, vector<1x32x128xbf16>
    %67 = vector.shape_cast %66 : vector<1x32x128xbf16> to vector<32x128xbf16>
    %68 = vector.extract_strided_slice %29 {offsets = [0, 224], sizes = [128, 32], strides = [1, 1]} : vector<128x288xbf16> to vector<128x32xbf16>
    %cst_41 = arith.constant dense<0.000000e+00> : vector<32x32xf32>
    %69 = tpu.matmul %67, %68, %cst_41 {dimension_numbers = #tpu.dot_dimension_numbers<[1], [0], [0], [1], [0, 0, 1, 1], [], []>} : vector<32x128xbf16>, vector<128x32xbf16>, vector<32x32xf32> -> vector<32x32xf32>
    %70 = arith.addf %65, %69 : vector<32x32xf32>
    %c8 = arith.constant 8 : index
    %c0_42 = arith.constant 0 : index
    %c0_43 = arith.constant 0 : index
    %71 = vector.load %arg4[%c8, %c0_42, %c0_43] : memref<9x32x128xbf16, #tpu.memory_space<vmem>>, vector<1x32x128xbf16>
    %72 = vector.shape_cast %71 : vector<1x32x128xbf16> to vector<32x128xbf16>
    %73 = vector.extract_strided_slice %29 {offsets = [0, 256], sizes = [128, 32], strides = [1, 1]} : vector<128x288xbf16> to vector<128x32xbf16>
    %cst_44 = arith.constant dense<0.000000e+00> : vector<32x32xf32>
    %74 = tpu.matmul %72, %73, %cst_44 {dimension_numbers = #tpu.dot_dimension_numbers<[1], [0], [0], [1], [0, 0, 1, 1], [], []>} : vector<32x128xbf16>, vector<128x32xbf16>, vector<32x32xf32> -> vector<32x32xf32>
    %75 = arith.addf %70, %74 : vector<32x32xf32>
    %c0_45 = arith.constant 0 : index
    %c0_46 = arith.constant 0 : index
    %76 = vector.load %arg6[%c0_45, %c0_46] : memref<1x32xf32, #tpu.memory_space<vmem>>, vector<1x32xf32>
    %77 = vector.broadcast %76 : vector<1x32xf32> to vector<32x32xf32>
    %78 = arith.addf %75, %77 : vector<32x32xf32>
    %cst_47 = arith.constant 0.000000e+00 : f32
    %79 = vector.broadcast %cst_47 : f32 to vector<32x32xf32>
    %80 = arith.maximumf %78, %79 : vector<32x32xf32>
    %c0_48 = arith.constant 0 : index
    %c0_49 = arith.constant 0 : index
    %81 = vector.load %arg7[%c0_48, %c0_49] : memref<1x32xf32, #tpu.memory_space<vmem>>, vector<1x32xf32>
    %82 = vector.broadcast %81 : vector<1x32xf32> to vector<32x32xf32>
    %83 = arith.mulf %80, %82 : vector<32x32xf32>
    %cst_50 = arith.constant dense<0.000000e+00> : vector<32xf32>
    %84 = vector.multi_reduction <add>, %83, %cst_50 [1] : vector<32x32xf32> to vector<32xf32>
    %85 = vector.shape_cast %84 : vector<32xf32> to vector<32x1xf32>
    %86 = vector.broadcast %25 : f32 to vector<32x1xf32>
    %87 = arith.addf %85, %86 : vector<32x1xf32>
    %cst_51 = arith.constant 0.000000e+00 : f32
    %88 = vector.broadcast %cst_51 : f32 to vector<32x1xf32>
    %89 = arith.subf %88, %87 : vector<32x1xf32>
    %90 = math.exp %89 : vector<32x1xf32>
    %cst_52 = arith.constant 1.000000e+00 : f32
    %91 = vector.broadcast %cst_52 : f32 to vector<32x1xf32>
    %92 = arith.addf %91, %90 : vector<32x1xf32>
    %93 = tpu.reciprocal %92 {approx = true} : vector<32x1xf32> -> vector<32x1xf32>
    %94 = vector.broadcast %93 : vector<32x1xf32> to vector<32x32xf32>
    %95 = arith.mulf %80, %94 : vector<32x32xf32>
    %96 = arith.addf %80, %95 : vector<32x32xf32>
    %c2_53 = arith.constant 2 : index
    %97 = memref.load %arg16[%c2_53] : memref<4xf32, #tpu.memory_space<smem>>
    %98 = arith.truncf %96 : vector<32x32xf32> to vector<32x32xbf16>
    %c0_54 = arith.constant 0 : index
    %c0_55 = arith.constant 0 : index
    %99 = vector.load %arg9[%c0_54, %c0_55] : memref<32x576xbf16, #tpu.memory_space<vmem>>, vector<32x576xbf16>
    %cst_56 = arith.constant dense<0.000000e+00> : vector<32x576xf32>
    %100 = tpu.matmul %98, %99, %cst_56 {dimension_numbers = #tpu.dot_dimension_numbers<[1], [0], [0], [1], [0, 0, 1, 1], [], []>} : vector<32x32xbf16>, vector<32x576xbf16>, vector<32x576xf32> -> vector<32x576xf32>
    %101 = arith.truncf %100 : vector<32x576xf32> to vector<32x576xbf16>
    %cst_57 = arith.constant 0.000000e+00 : f32
    %102 = vector.broadcast %cst_57 : f32 to vector<8x64xf32>
    %c0_58 = arith.constant 0 : index
    %c0_59 = arith.constant 0 : index
    %c0_60 = arith.constant 0 : index
    %103 = vector.load %arg8[%c0_58, %c0_59, %c0_60] : memref<9x8x32xbf16, #tpu.memory_space<vmem>>, vector<1x8x32xbf16>
    %104 = vector.shape_cast %103 : vector<1x8x32xbf16> to vector<8x32xbf16>
    %105 = vector.extract_strided_slice %101 {offsets = [0, 0], sizes = [32, 64], strides = [1, 1]} : vector<32x576xbf16> to vector<32x64xbf16>
    %cst_61 = arith.constant dense<0.000000e+00> : vector<8x64xf32>
    %106 = tpu.matmul %104, %105, %cst_61 {dimension_numbers = #tpu.dot_dimension_numbers<[1], [0], [0], [1], [0, 0, 1, 1], [], []>} : vector<8x32xbf16>, vector<32x64xbf16>, vector<8x64xf32> -> vector<8x64xf32>
    %107 = arith.addf %102, %106 : vector<8x64xf32>
    %c1_62 = arith.constant 1 : index
    %c0_63 = arith.constant 0 : index
    %c0_64 = arith.constant 0 : index
    %108 = vector.load %arg8[%c1_62, %c0_63, %c0_64] : memref<9x8x32xbf16, #tpu.memory_space<vmem>>, vector<1x8x32xbf16>
    %109 = vector.shape_cast %108 : vector<1x8x32xbf16> to vector<8x32xbf16>
    %110 = vector.extract_strided_slice %101 {offsets = [0, 64], sizes = [32, 64], strides = [1, 1]} : vector<32x576xbf16> to vector<32x64xbf16>
    %cst_65 = arith.constant dense<0.000000e+00> : vector<8x64xf32>
    %111 = tpu.matmul %109, %110, %cst_65 {dimension_numbers = #tpu.dot_dimension_numbers<[1], [0], [0], [1], [0, 0, 1, 1], [], []>} : vector<8x32xbf16>, vector<32x64xbf16>, vector<8x64xf32> -> vector<8x64xf32>
    %112 = arith.addf %107, %111 : vector<8x64xf32>
    %c2_66 = arith.constant 2 : index
    %c0_67 = arith.constant 0 : index
    %c0_68 = arith.constant 0 : index
    %113 = vector.load %arg8[%c2_66, %c0_67, %c0_68] : memref<9x8x32xbf16, #tpu.memory_space<vmem>>, vector<1x8x32xbf16>
    %114 = vector.shape_cast %113 : vector<1x8x32xbf16> to vector<8x32xbf16>
    %115 = vector.extract_strided_slice %101 {offsets = [0, 128], sizes = [32, 64], strides = [1, 1]} : vector<32x576xbf16> to vector<32x64xbf16>
    %cst_69 = arith.constant dense<0.000000e+00> : vector<8x64xf32>
    %116 = tpu.matmul %114, %115, %cst_69 {dimension_numbers = #tpu.dot_dimension_numbers<[1], [0], [0], [1], [0, 0, 1, 1], [], []>} : vector<8x32xbf16>, vector<32x64xbf16>, vector<8x64xf32> -> vector<8x64xf32>
    %117 = arith.addf %112, %116 : vector<8x64xf32>
    %c3_70 = arith.constant 3 : index
    %c0_71 = arith.constant 0 : index
    %c0_72 = arith.constant 0 : index
    %118 = vector.load %arg8[%c3_70, %c0_71, %c0_72] : memref<9x8x32xbf16, #tpu.memory_space<vmem>>, vector<1x8x32xbf16>
    %119 = vector.shape_cast %118 : vector<1x8x32xbf16> to vector<8x32xbf16>
    %120 = vector.extract_strided_slice %101 {offsets = [0, 192], sizes = [32, 64], strides = [1, 1]} : vector<32x576xbf16> to vector<32x64xbf16>
    %cst_73 = arith.constant dense<0.000000e+00> : vector<8x64xf32>
    %121 = tpu.matmul %119, %120, %cst_73 {dimension_numbers = #tpu.dot_dimension_numbers<[1], [0], [0], [1], [0, 0, 1, 1], [], []>} : vector<8x32xbf16>, vector<32x64xbf16>, vector<8x64xf32> -> vector<8x64xf32>
    %122 = arith.addf %117, %121 : vector<8x64xf32>
    %c4_74 = arith.constant 4 : index
    %c0_75 = arith.constant 0 : index
    %c0_76 = arith.constant 0 : index
    %123 = vector.load %arg8[%c4_74, %c0_75, %c0_76] : memref<9x8x32xbf16, #tpu.memory_space<vmem>>, vector<1x8x32xbf16>
    %124 = vector.shape_cast %123 : vector<1x8x32xbf16> to vector<8x32xbf16>
    %125 = vector.extract_strided_slice %101 {offsets = [0, 256], sizes = [32, 64], strides = [1, 1]} : vector<32x576xbf16> to vector<32x64xbf16>
    %cst_77 = arith.constant dense<0.000000e+00> : vector<8x64xf32>
    %126 = tpu.matmul %124, %125, %cst_77 {dimension_numbers = #tpu.dot_dimension_numbers<[1], [0], [0], [1], [0, 0, 1, 1], [], []>} : vector<8x32xbf16>, vector<32x64xbf16>, vector<8x64xf32> -> vector<8x64xf32>
    %127 = arith.addf %122, %126 : vector<8x64xf32>
    %c5_78 = arith.constant 5 : index
    %c0_79 = arith.constant 0 : index
    %c0_80 = arith.constant 0 : index
    %128 = vector.load %arg8[%c5_78, %c0_79, %c0_80] : memref<9x8x32xbf16, #tpu.memory_space<vmem>>, vector<1x8x32xbf16>
    %129 = vector.shape_cast %128 : vector<1x8x32xbf16> to vector<8x32xbf16>
    %130 = vector.extract_strided_slice %101 {offsets = [0, 320], sizes = [32, 64], strides = [1, 1]} : vector<32x576xbf16> to vector<32x64xbf16>
    %cst_81 = arith.constant dense<0.000000e+00> : vector<8x64xf32>
    %131 = tpu.matmul %129, %130, %cst_81 {dimension_numbers = #tpu.dot_dimension_numbers<[1], [0], [0], [1], [0, 0, 1, 1], [], []>} : vector<8x32xbf16>, vector<32x64xbf16>, vector<8x64xf32> -> vector<8x64xf32>
    %132 = arith.addf %127, %131 : vector<8x64xf32>
    %c6_82 = arith.constant 6 : index
    %c0_83 = arith.constant 0 : index
    %c0_84 = arith.constant 0 : index
    %133 = vector.load %arg8[%c6_82, %c0_83, %c0_84] : memref<9x8x32xbf16, #tpu.memory_space<vmem>>, vector<1x8x32xbf16>
    %134 = vector.shape_cast %133 : vector<1x8x32xbf16> to vector<8x32xbf16>
    %135 = vector.extract_strided_slice %101 {offsets = [0, 384], sizes = [32, 64], strides = [1, 1]} : vector<32x576xbf16> to vector<32x64xbf16>
    %cst_85 = arith.constant dense<0.000000e+00> : vector<8x64xf32>
    %136 = tpu.matmul %134, %135, %cst_85 {dimension_numbers = #tpu.dot_dimension_numbers<[1], [0], [0], [1], [0, 0, 1, 1], [], []>} : vector<8x32xbf16>, vector<32x64xbf16>, vector<8x64xf32> -> vector<8x64xf32>
    %137 = arith.addf %132, %136 : vector<8x64xf32>
    %c7_86 = arith.constant 7 : index
    %c0_87 = arith.constant 0 : index
    %c0_88 = arith.constant 0 : index
    %138 = vector.load %arg8[%c7_86, %c0_87, %c0_88] : memref<9x8x32xbf16, #tpu.memory_space<vmem>>, vector<1x8x32xbf16>
    %139 = vector.shape_cast %138 : vector<1x8x32xbf16> to vector<8x32xbf16>
    %140 = vector.extract_strided_slice %101 {offsets = [0, 448], sizes = [32, 64], strides = [1, 1]} : vector<32x576xbf16> to vector<32x64xbf16>
    %cst_89 = arith.constant dense<0.000000e+00> : vector<8x64xf32>
    %141 = tpu.matmul %139, %140, %cst_89 {dimension_numbers = #tpu.dot_dimension_numbers<[1], [0], [0], [1], [0, 0, 1, 1], [], []>} : vector<8x32xbf16>, vector<32x64xbf16>, vector<8x64xf32> -> vector<8x64xf32>
    %142 = arith.addf %137, %141 : vector<8x64xf32>
    %c8_90 = arith.constant 8 : index
    %c0_91 = arith.constant 0 : index
    %c0_92 = arith.constant 0 : index
    %143 = vector.load %arg8[%c8_90, %c0_91, %c0_92] : memref<9x8x32xbf16, #tpu.memory_space<vmem>>, vector<1x8x32xbf16>
    %144 = vector.shape_cast %143 : vector<1x8x32xbf16> to vector<8x32xbf16>
    %145 = vector.extract_strided_slice %101 {offsets = [0, 512], sizes = [32, 64], strides = [1, 1]} : vector<32x576xbf16> to vector<32x64xbf16>
    %cst_93 = arith.constant dense<0.000000e+00> : vector<8x64xf32>
    %146 = tpu.matmul %144, %145, %cst_93 {dimension_numbers = #tpu.dot_dimension_numbers<[1], [0], [0], [1], [0, 0, 1, 1], [], []>} : vector<8x32xbf16>, vector<32x64xbf16>, vector<8x64xf32> -> vector<8x64xf32>
    %147 = arith.addf %142, %146 : vector<8x64xf32>
    %c0_94 = arith.constant 0 : index
    %c0_95 = arith.constant 0 : index
    %148 = vector.load %arg10[%c0_94, %c0_95] : memref<1x64xf32, #tpu.memory_space<vmem>>, vector<1x64xf32>
    %149 = vector.broadcast %148 : vector<1x64xf32> to vector<8x64xf32>
    %150 = arith.addf %147, %149 : vector<8x64xf32>
    %cst_96 = arith.constant 0.000000e+00 : f32
    %151 = vector.broadcast %cst_96 : f32 to vector<8x64xf32>
    %152 = arith.maximumf %150, %151 : vector<8x64xf32>
    %c0_97 = arith.constant 0 : index
    %c0_98 = arith.constant 0 : index
    %153 = vector.load %arg11[%c0_97, %c0_98] : memref<1x64xf32, #tpu.memory_space<vmem>>, vector<1x64xf32>
    %154 = vector.broadcast %153 : vector<1x64xf32> to vector<8x64xf32>
    %155 = arith.mulf %152, %154 : vector<8x64xf32>
    %cst_99 = arith.constant dense<0.000000e+00> : vector<8xf32>
    %156 = vector.multi_reduction <add>, %155, %cst_99 [1] : vector<8x64xf32> to vector<8xf32>
    %157 = vector.shape_cast %156 : vector<8xf32> to vector<8x1xf32>
    %158 = vector.broadcast %97 : f32 to vector<8x1xf32>
    %159 = arith.addf %157, %158 : vector<8x1xf32>
    %cst_100 = arith.constant 0.000000e+00 : f32
    %160 = vector.broadcast %cst_100 : f32 to vector<8x1xf32>
    %161 = arith.subf %160, %159 : vector<8x1xf32>
    %162 = math.exp %161 : vector<8x1xf32>
    %cst_101 = arith.constant 1.000000e+00 : f32
    %163 = vector.broadcast %cst_101 : f32 to vector<8x1xf32>
    %164 = arith.addf %163, %162 : vector<8x1xf32>
    %165 = tpu.reciprocal %164 {approx = true} : vector<8x1xf32> -> vector<8x1xf32>
    %166 = vector.broadcast %165 : vector<8x1xf32> to vector<8x64xf32>
    %167 = arith.mulf %152, %166 : vector<8x64xf32>
    %168 = arith.addf %152, %167 : vector<8x64xf32>
    %c3_102 = arith.constant 3 : index
    %169 = memref.load %arg16[%c3_102] : memref<4xf32, #tpu.memory_space<smem>>
    %170 = arith.truncf %168 : vector<8x64xf32> to vector<8x64xbf16>
    %c0_103 = arith.constant 0 : index
    %c0_104 = arith.constant 0 : index
    %171 = vector.load %arg13[%c0_103, %c0_104] : memref<64x576xbf16, #tpu.memory_space<vmem>>, vector<64x576xbf16>
    %cst_105 = arith.constant dense<0.000000e+00> : vector<8x576xf32>
    %172 = tpu.matmul %170, %171, %cst_105 {dimension_numbers = #tpu.dot_dimension_numbers<[1], [0], [0], [1], [0, 0, 1, 1], [], []>} : vector<8x64xbf16>, vector<64x576xbf16>, vector<8x576xf32> -> vector<8x576xf32>
    %173 = arith.truncf %172 : vector<8x576xf32> to vector<8x576xbf16>
    %cst_106 = arith.constant 0.000000e+00 : f32
    %174 = vector.broadcast %cst_106 : f32 to vector<2x64xf32>
    %c0_107 = arith.constant 0 : index
    %c0_108 = arith.constant 0 : index
    %c0_109 = arith.constant 0 : index
    %175 = vector.load %arg12[%c0_107, %c0_108, %c0_109] : memref<9x2x8xbf16, #tpu.memory_space<vmem>>, vector<1x2x8xbf16>
    %176 = vector.shape_cast %175 : vector<1x2x8xbf16> to vector<2x8xbf16>
    %177 = vector.extract_strided_slice %173 {offsets = [0, 0], sizes = [8, 64], strides = [1, 1]} : vector<8x576xbf16> to vector<8x64xbf16>
    %cst_110 = arith.constant dense<0.000000e+00> : vector<2x64xf32>
    %178 = tpu.matmul %176, %177, %cst_110 {dimension_numbers = #tpu.dot_dimension_numbers<[1], [0], [0], [1], [0, 0, 1, 1], [], []>} : vector<2x8xbf16>, vector<8x64xbf16>, vector<2x64xf32> -> vector<2x64xf32>
    %179 = arith.addf %174, %178 : vector<2x64xf32>
    %c1_111 = arith.constant 1 : index
    %c0_112 = arith.constant 0 : index
    %c0_113 = arith.constant 0 : index
    %180 = vector.load %arg12[%c1_111, %c0_112, %c0_113] : memref<9x2x8xbf16, #tpu.memory_space<vmem>>, vector<1x2x8xbf16>
    %181 = vector.shape_cast %180 : vector<1x2x8xbf16> to vector<2x8xbf16>
    %182 = vector.extract_strided_slice %173 {offsets = [0, 64], sizes = [8, 64], strides = [1, 1]} : vector<8x576xbf16> to vector<8x64xbf16>
    %cst_114 = arith.constant dense<0.000000e+00> : vector<2x64xf32>
    %183 = tpu.matmul %181, %182, %cst_114 {dimension_numbers = #tpu.dot_dimension_numbers<[1], [0], [0], [1], [0, 0, 1, 1], [], []>} : vector<2x8xbf16>, vector<8x64xbf16>, vector<2x64xf32> -> vector<2x64xf32>
    %184 = arith.addf %179, %183 : vector<2x64xf32>
    %c2_115 = arith.constant 2 : index
    %c0_116 = arith.constant 0 : index
    %c0_117 = arith.constant 0 : index
    %185 = vector.load %arg12[%c2_115, %c0_116, %c0_117] : memref<9x2x8xbf16, #tpu.memory_space<vmem>>, vector<1x2x8xbf16>
    %186 = vector.shape_cast %185 : vector<1x2x8xbf16> to vector<2x8xbf16>
    %187 = vector.extract_strided_slice %173 {offsets = [0, 128], sizes = [8, 64], strides = [1, 1]} : vector<8x576xbf16> to vector<8x64xbf16>
    %cst_118 = arith.constant dense<0.000000e+00> : vector<2x64xf32>
    %188 = tpu.matmul %186, %187, %cst_118 {dimension_numbers = #tpu.dot_dimension_numbers<[1], [0], [0], [1], [0, 0, 1, 1], [], []>} : vector<2x8xbf16>, vector<8x64xbf16>, vector<2x64xf32> -> vector<2x64xf32>
    %189 = arith.addf %184, %188 : vector<2x64xf32>
    %c3_119 = arith.constant 3 : index
    %c0_120 = arith.constant 0 : index
    %c0_121 = arith.constant 0 : index
    %190 = vector.load %arg12[%c3_119, %c0_120, %c0_121] : memref<9x2x8xbf16, #tpu.memory_space<vmem>>, vector<1x2x8xbf16>
    %191 = vector.shape_cast %190 : vector<1x2x8xbf16> to vector<2x8xbf16>
    %192 = vector.extract_strided_slice %173 {offsets = [0, 192], sizes = [8, 64], strides = [1, 1]} : vector<8x576xbf16> to vector<8x64xbf16>
    %cst_122 = arith.constant dense<0.000000e+00> : vector<2x64xf32>
    %193 = tpu.matmul %191, %192, %cst_122 {dimension_numbers = #tpu.dot_dimension_numbers<[1], [0], [0], [1], [0, 0, 1, 1], [], []>} : vector<2x8xbf16>, vector<8x64xbf16>, vector<2x64xf32> -> vector<2x64xf32>
    %194 = arith.addf %189, %193 : vector<2x64xf32>
    %c4_123 = arith.constant 4 : index
    %c0_124 = arith.constant 0 : index
    %c0_125 = arith.constant 0 : index
    %195 = vector.load %arg12[%c4_123, %c0_124, %c0_125] : memref<9x2x8xbf16, #tpu.memory_space<vmem>>, vector<1x2x8xbf16>
    %196 = vector.shape_cast %195 : vector<1x2x8xbf16> to vector<2x8xbf16>
    %197 = vector.extract_strided_slice %173 {offsets = [0, 256], sizes = [8, 64], strides = [1, 1]} : vector<8x576xbf16> to vector<8x64xbf16>
    %cst_126 = arith.constant dense<0.000000e+00> : vector<2x64xf32>
    %198 = tpu.matmul %196, %197, %cst_126 {dimension_numbers = #tpu.dot_dimension_numbers<[1], [0], [0], [1], [0, 0, 1, 1], [], []>} : vector<2x8xbf16>, vector<8x64xbf16>, vector<2x64xf32> -> vector<2x64xf32>
    %199 = arith.addf %194, %198 : vector<2x64xf32>
    %c5_127 = arith.constant 5 : index
    %c0_128 = arith.constant 0 : index
    %c0_129 = arith.constant 0 : index
    %200 = vector.load %arg12[%c5_127, %c0_128, %c0_129] : memref<9x2x8xbf16, #tpu.memory_space<vmem>>, vector<1x2x8xbf16>
    %201 = vector.shape_cast %200 : vector<1x2x8xbf16> to vector<2x8xbf16>
    %202 = vector.extract_strided_slice %173 {offsets = [0, 320], sizes = [8, 64], strides = [1, 1]} : vector<8x576xbf16> to vector<8x64xbf16>
    %cst_130 = arith.constant dense<0.000000e+00> : vector<2x64xf32>
    %203 = tpu.matmul %201, %202, %cst_130 {dimension_numbers = #tpu.dot_dimension_numbers<[1], [0], [0], [1], [0, 0, 1, 1], [], []>} : vector<2x8xbf16>, vector<8x64xbf16>, vector<2x64xf32> -> vector<2x64xf32>
    %204 = arith.addf %199, %203 : vector<2x64xf32>
    %c6_131 = arith.constant 6 : index
    %c0_132 = arith.constant 0 : index
    %c0_133 = arith.constant 0 : index
    %205 = vector.load %arg12[%c6_131, %c0_132, %c0_133] : memref<9x2x8xbf16, #tpu.memory_space<vmem>>, vector<1x2x8xbf16>
    %206 = vector.shape_cast %205 : vector<1x2x8xbf16> to vector<2x8xbf16>
    %207 = vector.extract_strided_slice %173 {offsets = [0, 384], sizes = [8, 64], strides = [1, 1]} : vector<8x576xbf16> to vector<8x64xbf16>
    %cst_134 = arith.constant dense<0.000000e+00> : vector<2x64xf32>
    %208 = tpu.matmul %206, %207, %cst_134 {dimension_numbers = #tpu.dot_dimension_numbers<[1], [0], [0], [1], [0, 0, 1, 1], [], []>} : vector<2x8xbf16>, vector<8x64xbf16>, vector<2x64xf32> -> vector<2x64xf32>
    %209 = arith.addf %204, %208 : vector<2x64xf32>
    %c7_135 = arith.constant 7 : index
    %c0_136 = arith.constant 0 : index
    %c0_137 = arith.constant 0 : index
    %210 = vector.load %arg12[%c7_135, %c0_136, %c0_137] : memref<9x2x8xbf16, #tpu.memory_space<vmem>>, vector<1x2x8xbf16>
    %211 = vector.shape_cast %210 : vector<1x2x8xbf16> to vector<2x8xbf16>
    %212 = vector.extract_strided_slice %173 {offsets = [0, 448], sizes = [8, 64], strides = [1, 1]} : vector<8x576xbf16> to vector<8x64xbf16>
    %cst_138 = arith.constant dense<0.000000e+00> : vector<2x64xf32>
    %213 = tpu.matmul %211, %212, %cst_138 {dimension_numbers = #tpu.dot_dimension_numbers<[1], [0], [0], [1], [0, 0, 1, 1], [], []>} : vector<2x8xbf16>, vector<8x64xbf16>, vector<2x64xf32> -> vector<2x64xf32>
    %214 = arith.addf %209, %213 : vector<2x64xf32>
    %c8_139 = arith.constant 8 : index
    %c0_140 = arith.constant 0 : index
    %c0_141 = arith.constant 0 : index
    %215 = vector.load %arg12[%c8_139, %c0_140, %c0_141] : memref<9x2x8xbf16, #tpu.memory_space<vmem>>, vector<1x2x8xbf16>
    %216 = vector.shape_cast %215 : vector<1x2x8xbf16> to vector<2x8xbf16>
    %217 = vector.extract_strided_slice %173 {offsets = [0, 512], sizes = [8, 64], strides = [1, 1]} : vector<8x576xbf16> to vector<8x64xbf16>
    %cst_142 = arith.constant dense<0.000000e+00> : vector<2x64xf32>
    %218 = tpu.matmul %216, %217, %cst_142 {dimension_numbers = #tpu.dot_dimension_numbers<[1], [0], [0], [1], [0, 0, 1, 1], [], []>} : vector<2x8xbf16>, vector<8x64xbf16>, vector<2x64xf32> -> vector<2x64xf32>
    %219 = arith.addf %214, %218 : vector<2x64xf32>
    %c0_143 = arith.constant 0 : index
    %c0_144 = arith.constant 0 : index
    %220 = vector.load %arg14[%c0_143, %c0_144] : memref<1x64xf32, #tpu.memory_space<vmem>>, vector<1x64xf32>
    %221 = vector.broadcast %220 : vector<1x64xf32> to vector<2x64xf32>
    %222 = arith.addf %219, %221 : vector<2x64xf32>
    %cst_145 = arith.constant 0.000000e+00 : f32
    %223 = vector.broadcast %cst_145 : f32 to vector<2x64xf32>
    %224 = arith.maximumf %222, %223 : vector<2x64xf32>
    %c0_146 = arith.constant 0 : index
    %c0_147 = arith.constant 0 : index
    %225 = vector.load %arg15[%c0_146, %c0_147] : memref<1x64xf32, #tpu.memory_space<vmem>>, vector<1x64xf32>
    %226 = vector.broadcast %225 : vector<1x64xf32> to vector<2x64xf32>
    %227 = arith.mulf %224, %226 : vector<2x64xf32>
    %cst_148 = arith.constant dense<0.000000e+00> : vector<2xf32>
    %228 = vector.multi_reduction <add>, %227, %cst_148 [1] : vector<2x64xf32> to vector<2xf32>
    %229 = vector.shape_cast %228 : vector<2xf32> to vector<2x1xf32>
    %230 = vector.broadcast %169 : f32 to vector<2x1xf32>
    %231 = arith.addf %229, %230 : vector<2x1xf32>
    %cst_149 = arith.constant 0.000000e+00 : f32
    %232 = vector.broadcast %cst_149 : f32 to vector<2x1xf32>
    %233 = arith.subf %232, %231 : vector<2x1xf32>
    %234 = math.exp %233 : vector<2x1xf32>
    %cst_150 = arith.constant 1.000000e+00 : f32
    %235 = vector.broadcast %cst_150 : f32 to vector<2x1xf32>
    %236 = arith.addf %235, %234 : vector<2x1xf32>
    %237 = tpu.reciprocal %236 {approx = true} : vector<2x1xf32> -> vector<2x1xf32>
    %238 = vector.broadcast %237 : vector<2x1xf32> to vector<2x64xf32>
    %239 = arith.mulf %224, %238 : vector<2x64xf32>
    %240 = arith.addf %224, %239 : vector<2x64xf32>
    %c0_151 = arith.constant 0 : index
    %c0_152 = arith.constant 0 : index
    %241 = vector.load %arg17[%c0_151, %c0_152] : memref<1x64xf32, #tpu.memory_space<vmem>>, vector<1x64xf32>
    %c0_153 = arith.constant 0 : index
    %c0_154 = arith.constant 0 : index
    %242 = vector.load %arg18[%c0_153, %c0_154] : memref<1x64xf32, #tpu.memory_space<vmem>>, vector<1x64xf32>
    %243 = arith.mulf %241, %242 : vector<1x64xf32>
    %244 = vector.broadcast %243 : vector<1x64xf32> to vector<2x64xf32>
    %245 = arith.addf %240, %244 : vector<2x64xf32>
    %246 = arith.truncf %245 : vector<2x64xf32> to vector<2x64xbf16>
    %c0_155 = arith.constant 0 : index
    %c0_156 = arith.constant 0 : index
    %247 = vector.load %arg19[%c0_155, %c0_156] : memref<64x256xbf16, #tpu.memory_space<vmem>>, vector<64x256xbf16>
    %cst_157 = arith.constant dense<0.000000e+00> : vector<2x256xf32>
    %248 = tpu.matmul %246, %247, %cst_157 {dimension_numbers = #tpu.dot_dimension_numbers<[1], [0], [0], [1], [0, 0, 1, 1], [], []>} : vector<2x64xbf16>, vector<64x256xbf16>, vector<2x256xf32> -> vector<2x256xf32>
    %c0_158 = arith.constant 0 : index
    %c0_159 = arith.constant 0 : index
    %249 = vector.load %arg20[%c0_158, %c0_159] : memref<1x256xf32, #tpu.memory_space<vmem>>, vector<1x256xf32>
    %250 = vector.broadcast %249 : vector<1x256xf32> to vector<2x256xf32>
    %251 = arith.addf %248, %250 : vector<2x256xf32>
    %cst_160 = arith.constant 0.000000e+00 : f32
    %252 = vector.broadcast %cst_160 : f32 to vector<2x256xf32>
    %253 = arith.maximumf %251, %252 : vector<2x256xf32>
    %254 = arith.truncf %253 : vector<2x256xf32> to vector<2x256xbf16>
    %c0_161 = arith.constant 0 : index
    %c0_162 = arith.constant 0 : index
    %255 = vector.load %arg21[%c0_161, %c0_162] : memref<256x7xbf16, #tpu.memory_space<vmem>>, vector<256x7xbf16>
    %cst_163 = arith.constant dense<0.000000e+00> : vector<2x7xf32>
    %256 = tpu.matmul %254, %255, %cst_163 {dimension_numbers = #tpu.dot_dimension_numbers<[1], [0], [0], [1], [0, 0, 1, 1], [], []>} : vector<2x256xbf16>, vector<256x7xbf16>, vector<2x7xf32> -> vector<2x7xf32>
    %c0_164 = arith.constant 0 : index
    %c0_165 = arith.constant 0 : index
    %257 = vector.load %arg22[%c0_164, %c0_165] : memref<1x7xf32, #tpu.memory_space<vmem>>, vector<1x7xf32>
    %258 = vector.broadcast %257 : vector<1x7xf32> to vector<2x7xf32>
    %259 = arith.addf %256, %258 : vector<2x7xf32>
    %260 = vector.extract_strided_slice %259 {offsets = [0, 0], sizes = [2, 1], strides = [1, 1]} : vector<2x7xf32> to vector<2x1xf32>
    %261 = vector.extract_strided_slice %259 {offsets = [0, 1], sizes = [2, 6], strides = [1, 1]} : vector<2x7xf32> to vector<2x6xf32>
    %262 = vector.broadcast %260 : vector<2x1xf32> to vector<2x6xf32>
    %263 = arith.addf %262, %261 : vector<2x6xf32>
    %264 = vector.shape_cast %261 : vector<2x6xf32> to vector<1x2x6xf32>
    %cst_166 = arith.constant dense<0.000000e+00> : vector<1xf32>
    %265 = vector.multi_reduction <add>, %264, %cst_166 [1, 2] : vector<1x2x6xf32> to vector<1xf32>
    %266 = vector.shape_cast %265 : vector<1xf32> to vector<1x1x1xf32>
    %267 = vector.extract %266[0, 0, 0] : f32 from vector<1x1x1xf32>
    %cst_167 = arith.constant 1.200000e+01 : f32
    %268 = arith.divf %267, %cst_167 : f32
    %269 = vector.broadcast %268 : f32 to vector<2x6xf32>
    %270 = arith.subf %263, %269 : vector<2x6xf32>
    %c0_168 = arith.constant 0 : index
    %c0_169 = arith.constant 0 : index
    %271 = vector.load %arg23[%c0_168, %c0_169] : memref<2x6xf32, #tpu.memory_space<vmem>>, vector<2x6xf32>
    tpu.vector_store %arg23[%c0_168, %c0_169], %270 {strides = array<i32>} : memref<2x6xf32, #tpu.memory_space<vmem>>, vector<2x6xf32>,
    return
  }
}

</mosaic_0001>

<llo_original>
// kernel: tpu_custom_call.1
$region0: #{tpu_custom_call.1}
  #allocation0 [shape = 'u32[]', space=smem, size = 0x4, offset = 0x4, fixed_abs, tag = 'smem constant byte address 0x4 - core index']
  #allocation1 [shape = 'u32[72,128]{1,0:T(1,128)}', space=vmem, size = 0x9000, scoped, tag = 'internal scratch']
  %s0 = inlined_call_operand.vmem [shape: bf16[128,36], index: 0, kind: input, shape index: {}]
  %s1 = inlined_call_operand.vmem [shape: bf16[36,32], index: 1, kind: input, shape index: {}]
  %s2 = inlined_call_operand.vmem [shape: f32[1,32], index: 2, kind: input, shape index: {}]
  %s3 = inlined_call_operand.vmem [shape: f32[1,32], index: 3, kind: input, shape index: {}]
  %s4 = inlined_call_operand.hbm [shape: bf16[9,32,128], index: 4, kind: input, shape index: {}]
  %s5 = inlined_call_operand.hbm [shape: bf16[32,288], index: 5, kind: input, shape index: {}]
  %s6 = inlined_call_operand.vmem [shape: f32[1,32], index: 6, kind: input, shape index: {}]
  %s7 = inlined_call_operand.vmem [shape: f32[1,32], index: 7, kind: input, shape index: {}]
  %s8 = inlined_call_operand.hbm [shape: bf16[9,8,32], index: 8, kind: input, shape index: {}]
  %s9 = inlined_call_operand.hbm [shape: bf16[32,576], index: 9, kind: input, shape index: {}]
  %s10 = inlined_call_operand.vmem [shape: f32[1,64], index: 10, kind: input, shape index: {}]
  %s11 = inlined_call_operand.vmem [shape: f32[1,64], index: 11, kind: input, shape index: {}]
  %s12 = inlined_call_operand.vmem [shape: bf16[9,2,8], index: 12, kind: input, shape index: {}]
  %s13 = inlined_call_operand.vmem [shape: bf16[64,576], index: 13, kind: input, shape index: {}]
  %s14 = inlined_call_operand.hbm [shape: f32[1,64], index: 14, kind: input, shape index: {}]
  %s15 = inlined_call_operand.vmem [shape: f32[1,64], index: 15, kind: input, shape index: {}]
  %s16 = inlined_call_operand.vmem [shape: f32[4], index: 16, kind: input, shape index: {}]
  %s17 = inlined_call_operand.vmem [shape: f32[1,64], index: 17, kind: input, shape index: {}]
  %s18 = inlined_call_operand.vmem [shape: f32[1,64], index: 18, kind: input, shape index: {}]
  %s19 = inlined_call_operand.vmem [shape: bf16[64,256], index: 19, kind: input, shape index: {}]
  %s20 = inlined_call_operand.vmem [shape: f32[1,256], index: 20, kind: input, shape index: {}]
  %s21 = inlined_call_operand.vmem [shape: bf16[256,7], index: 21, kind: input, shape index: {}]
  %s22 = inlined_call_operand.vmem [shape: f32[1,7], index: 22, kind: input, shape index: {}]
  %s23 = inlined_call_operand.hbm [shape: f32[2,6], index: 23, kind: output, shape index: {}]
  %s24 = sld [smem:[#allocation0]]
  $region126: #{tpu_custom_call.1} parent=0
    _
  %s26 = ssub.s32 1, %s24
  %s27 = scalar_select 0, %s26, %s24
  $region1: #{tpu_custom_call.1} parent=0
    #allocation2 [shape = 'u8[73728]{0}', space=vmem, size = 0x12000, scoped, tag = 'input window, operand 4, single buffered']
    #allocation3 [shape = 's32[1]{0}', space=sflag, size = 0x4, scoped, tag = 'scoped memory for tpu_custom_call.1']
    #allocation4 [shape = 's32[1]{0}', space=sflag, size = 0x4, scoped, tag = 'scoped memory for tpu_custom_call.1']
    #allocation5 [shape = 's32[1]{0}', space=sflag, size = 0x4, scoped, tag = 'scoped memory for tpu_custom_call.1']
    #allocation6 [shape = 'u8[24576]{0}', space=vmem, size = 0x6000, scoped, tag = 'input window, operand 5, single buffered']
    #allocation7 [shape = 's32[1]{0}', space=sflag, size = 0x4, scoped, tag = 'scoped memory for tpu_custom_call.1']
    #allocation8 [shape = 'u8[18432]{0}', space=vmem, size = 0x4800, scoped, tag = 'input window, operand 8, single buffered']
    #allocation9 [shape = 'u8[40960]{0}', space=vmem, size = 0xa000, scoped, tag = 'input window, operand 9, single buffered']
    #allocation10 [shape = 's32[1]{0}', space=sflag, size = 0x4, scoped, tag = 'scoped memory for tpu_custom_call.1']
    #allocation11 [shape = 'u8[512]{0}', space=vmem, size = 0x400, scoped, tag = 'input window, operand 14, single buffered']
    #allocation12 [shape = 'u8[512]{0}', space=smem, size = 0x200, scoped, tag = 'input window, operand 16, single buffered']
    #allocation13 [shape = 'u8[1024]{0}', space=vmem, size = 0x400, scoped, tag = 'output window, operand 0, single buffered']
    %28 = vsyncpa [#allocation3], 0
    %29 = vsyncpa [#allocation7], 0
    %30 = vsyncpa [#allocation10], 0
    %31 = vsyncpa [#allocation5], 0
    %32 = vsyncpa [#allocation4], 0
    // Predicated region
    $region2: #{tpu_custom_call.1} parent=1 // pred_check
      _
    $region3: #{tpu_custom_call.1} parent=1 // pred_check_branch
      %34 = sbr.rel (0) target = $region5
    $region4: #{tpu_custom_call.1} parent=1 // pred_region
      _
    $region5: #{tpu_custom_call.1} parent=1 // pred_fallthru
      _
    // Predicated region
    $region6: #{tpu_custom_call.1} parent=1 // pred_check
      _
    $region7: #{tpu_custom_call.1} parent=1 // pred_check_branch
      %36 = sbr.rel (0) target = $region9
    $region8: #{tpu_custom_call.1} parent=1 // pred_region
      _
    $region9: #{tpu_custom_call.1} parent=1 // pred_fallthru
      _
    // Predicated region
    $region10: #{tpu_custom_call.1} parent=1 // pred_check
      _
    $region11: #{tpu_custom_call.1} parent=1 // pred_check_branch
      %38 = sbr.rel (0) target = $region13
    $region12: #{tpu_custom_call.1} parent=1 // pred_region
      _
    $region13: #{tpu_custom_call.1} parent=1 // pred_fallthru
      _
    // Predicated region
    $region14: #{tpu_custom_call.1} parent=1 // pred_check
      _
    $region15: #{tpu_custom_call.1} parent=1 // pred_check_branch
      %40 = sbr.rel (0) target = $region17
    $region16: #{tpu_custom_call.1} parent=1 // pred_region
      _
    $region17: #{tpu_custom_call.1} parent=1 // pred_fallthru
      _
    // Predicated region
    $region18: #{tpu_custom_call.1} parent=1 // pred_check
      _
    $region19: #{tpu_custom_call.1} parent=1 // pred_check_branch
      %42 = sbr.rel (0) target = $region21
    $region20: #{tpu_custom_call.1} parent=1 // pred_region
      %44 = vsyncadd [#allocation3], 0
      %s45 = sshll.u32 %s4, 4
      %s46 = int_to_ptr.hbm [resolvable:$true] %s45
      %s47 = sshll.u32 [#allocation2], 4
      %s48 = int_to_ptr.vmem [resolvable:$true] %s47
      %53 = dma.hbm_to_vmem [thread:$0]  %s46, 2304, %s48, [#allocation3], 64, 64, 4
    $region21: #{tpu_custom_call.1} parent=1 // pred_fallthru
      _
    // Predicated region
    $region22: #{tpu_custom_call.1} parent=1 // pred_check
      _
    $region23: #{tpu_custom_call.1} parent=1 // pred_check_branch
      %55 = sbr.rel (0) target = $region25
    $region24: #{tpu_custom_call.1} parent=1 // pred_region
      %57 = vsyncadd [#allocation7], 0
      %s58 = sshll.u32 %s5, 4
      %s59 = int_to_ptr.hbm [resolvable:$true] %s58
      %s60 = sshll.u32 [#allocation6], 4
      %s61 = int_to_ptr.vmem [resolvable:$true] %s60
      %66 = dma.hbm_to_vmem [thread:$0]  %s59, 768, %s61, [#allocation7], 192, 192, 12
    $region25: #{tpu_custom_call.1} parent=1 // pred_fallthru
      _
    // Predicated region
    $region26: #{tpu_custom_call.1} parent=1 // pred_check
      _
    $region27: #{tpu_custom_call.1} parent=1 // pred_check_branch
      %68 = sbr.rel (0) target = $region29
    $region28: #{tpu_custom_call.1} parent=1 // pred_region
      _
    $region29: #{tpu_custom_call.1} parent=1 // pred_fallthru
      _
    // Predicated region
    $region30: #{tpu_custom_call.1} parent=1 // pred_check
      _
    $region31: #{tpu_custom_call.1} parent=1 // pred_check_branch
      %70 = sbr.rel (0) target = $region33
    $region32: #{tpu_custom_call.1} parent=1 // pred_region
      _
    $region33: #{tpu_custom_call.1} parent=1 // pred_fallthru
      _
    // Predicated region
    $region34: #{tpu_custom_call.1} parent=1 // pred_check
      _
    $region35: #{tpu_custom_call.1} parent=1 // pred_check_branch
      %72 = sbr.rel (0) target = $region37
    $region36: #{tpu_custom_call.1} parent=1 // pred_region
      %74 = vsyncadd [#allocation7], 0
      %s75 = sshll.u32 %s8, 4
      %s76 = int_to_ptr.hbm [resolvable:$true] %s75
      %s77 = sshll.u32 [#allocation8], 4
      %s78 = int_to_ptr.vmem [resolvable:$true] %s77
      %83 = dma.hbm_to_vmem [thread:$0]  %s76, 576, %s78, [#allocation7], 64, 64, 4
    $region37: #{tpu_custom_call.1} parent=1 // pred_fallthru
      _
    // Predicated region
    $region38: #{tpu_custom_call.1} parent=1 // pred_check
      _
    $region39: #{tpu_custom_call.1} parent=1 // pred_check_branch
      %85 = sbr.rel (0) target = $region41
    $region40: #{tpu_custom_call.1} parent=1 // pred_region
      %87 = vsyncadd [#allocation10], 0
      %s88 = sshll.u32 %s9, 4
      %s89 = int_to_ptr.hbm [resolvable:$true] %s88
      %s90 = sshll.u32 [#allocation9], 4
      %s91 = int_to_ptr.vmem [resolvable:$true] %s90
      %96 = dma.hbm_to_vmem [thread:$0]  %s89, 1280, %s91, [#allocation10], 320, 320, 20
    $region41: #{tpu_custom_call.1} parent=1 // pred_fallthru
      _
    // Predicated region
    $region42: #{tpu_custom_call.1} parent=1 // pred_check
      _
    $region43: #{tpu_custom_call.1} parent=1 // pred_check_branch
      %98 = sbr.rel (0) target = $region45
    $region44: #{tpu_custom_call.1} parent=1 // pred_region
      _
    $region45: #{tpu_custom_call.1} parent=1 // pred_fallthru
      _
    // Predicated region
    $region46: #{tpu_custom_call.1} parent=1 // pred_check
      _
    $region47: #{tpu_custom_call.1} parent=1 // pred_check_branch
      %100 = sbr.rel (0) target = $region49
    $region48: #{tpu_custom_call.1} parent=1 // pred_region
      _
    $region49: #{tpu_custom_call.1} parent=1 // pred_fallthru
      _
    // Predicated region
    $region50: #{tpu_custom_call.1} parent=1 // pred_check
      _
    $region51: #{tpu_custom_call.1} parent=1 // pred_check_branch
      %102 = sbr.rel (0) target = $region53
    $region52: #{tpu_custom_call.1} parent=1 // pred_region
      _
    $region53: #{tpu_custom_call.1} parent=1 // pred_fallthru
      _
    // Predicated region
    $region54: #{tpu_custom_call.1} parent=1 // pred_check
      _
    $region55: #{tpu_custom_call.1} parent=1 // pred_check_branch
      %104 = sbr.rel (0) target = $region57
    $region56: #{tpu_custom_call.1} parent=1 // pred_region
      _
    $region57: #{tpu_custom_call.1} parent=1 // pred_fallthru
      _
    // Predicated region
    $region58: #{tpu_custom_call.1} parent=1 // pred_check
      _
    $region59: #{tpu_custom_call.1} parent=1 // pred_check_branch
      %106 = sbr.rel (0) target = $region61
    $region60: #{tpu_custom_call.1} parent=1 // pred_region
      %108 = vsyncadd [#allocation10], 0
      %s110 = sshll.u32 %s14, 4
      %s111 = int_to_ptr.hbm [resolvable:$true] %s110
      %s112 = sshll.u32 [#allocation11], 4
      %s113 = int_to_ptr.vmem [resolvable:$true] %s112
      %115 = dma.hbm_to_vmem [thread:$0]  %s111, 16, %s113, [#allocation10]
    $region61: #{tpu_custom_call.1} parent=1 // pred_fallthru
      _
    // Predicated region
    $region62: #{tpu_custom_call.1} parent=1 // pred_check
      _
    $region63: #{tpu_custom_call.1} parent=1 // pred_check_branch
      %117 = sbr.rel (0) target = $region65
    $region64: #{tpu_custom_call.1} parent=1 // pred_region
      _
    $region65: #{tpu_custom_call.1} parent=1 // pred_fallthru
      _
    // Predicated region
    $region66: #{tpu_custom_call.1} parent=1 // pred_check
      _
    $region67: #{tpu_custom_call.1} parent=1 // pred_check_branch
      %119 = sbr.rel (0) target = $region69
    $region68: #{tpu_custom_call.1} parent=1 // pred_region
      %121 = vsyncadd [#allocation5], 0
      %s123 = sshll.u32 %s16, 4
      %s124 = int_to_ptr.vmem [resolvable:$true] %s123
      %126 = dma.vmem_to_smem %s124, 16, [#allocation12], [#allocation5]
    $region69: #{tpu_custom_call.1} parent=1 // pred_fallthru
      _
    // Predicated region
    $region70: #{tpu_custom_call.1} parent=1 // pred_check
      _
    $region71: #{tpu_custom_call.1} parent=1 // pred_check_branch
      %128 = sbr.rel (0) target = $region73
    $region72: #{tpu_custom_call.1} parent=1 // pred_region
      _
    $region73: #{tpu_custom_call.1} parent=1 // pred_fallthru
      _
    // Predicated region
    $region74: #{tpu_custom_call.1} parent=1 // pred_check
      _
    $region75: #{tpu_custom_call.1} parent=1 // pred_check_branch
      %130 = sbr.rel (0) target = $region77
    $region76: #{tpu_custom_call.1} parent=1 // pred_region
      _
    $region77: #{tpu_custom_call.1} parent=1 // pred_fallthru
      _
    // Predicated region
    $region78: #{tpu_custom_call.1} parent=1 // pred_check
      _
    $region79: #{tpu_custom_call.1} parent=1 // pred_check_branch
      %132 = sbr.rel (0) target = $region81
    $region80: #{tpu_custom_call.1} parent=1 // pred_region
      _
    $region81: #{tpu_custom_call.1} parent=1 // pred_fallthru
      _
    // Predicated region
    $region82: #{tpu_custom_call.1} parent=1 // pred_check
      _
    $region83: #{tpu_custom_call.1} parent=1 // pred_check_branch
      %134 = sbr.rel (0) target = $region85
    $region84: #{tpu_custom_call.1} parent=1 // pred_region
      _
    $region85: #{tpu_custom_call.1} parent=1 // pred_fallthru
      _
    // Predicated region
    $region86: #{tpu_custom_call.1} parent=1 // pred_check
      _
    $region87: #{tpu_custom_call.1} parent=1 // pred_check_branch
      %136 = sbr.rel (0) target = $region89
    $region88: #{tpu_custom_call.1} parent=1 // pred_region
      _
    $region89: #{tpu_custom_call.1} parent=1 // pred_fallthru
      _
    // Predicated region
    $region90: #{tpu_custom_call.1} parent=1 // pred_check
      _
    $region91: #{tpu_custom_call.1} parent=1 // pred_check_branch
      %138 = sbr.rel (0) target = $region93
    $region92: #{tpu_custom_call.1} parent=1 // pred_region
      _
    $region93: #{tpu_custom_call.1} parent=1 // pred_fallthru
      _
    // Predicated region
    $region94: #{tpu_custom_call.1} parent=1 // pred_check
      _
    $region95: #{tpu_custom_call.1} parent=1 // pred_check_branch
      %140 = sbr.rel (0) target = $region97
    $region96: #{tpu_custom_call.1} parent=1 // pred_region
      %142 = dma.done [#allocation3], 2304
    $region97: #{tpu_custom_call.1} parent=1 // pred_fallthru
      _
    // Predicated region
    $region98: #{tpu_custom_call.1} parent=1 // pred_check
      _
    $region99: #{tpu_custom_call.1} parent=1 // pred_check_branch
      %144 = sbr.rel (0) target = $region101
    $region100: #{tpu_custom_call.1} parent=1 // pred_region
      %146 = dma.done [#allocation7], 768
    $region101: #{tpu_custom_call.1} parent=1 // pred_fallthru
      _
    // Predicated region
    $region102: #{tpu_custom_call.1} parent=1 // pred_check
      _
    $region103: #{tpu_custom_call.1} parent=1 // pred_check_branch
      %148 = sbr.rel (0) target = $region105
    $region104: #{tpu_custom_call.1} parent=1 // pred_region
      %150 = dma.done [#allocation7], 576
    $region105: #{tpu_custom_call.1} parent=1 // pred_fallthru
      _
    // Predicated region
    $region106: #{tpu_custom_call.1} parent=1 // pred_check
      _
    $region107: #{tpu_custom_call.1} parent=1 // pred_check_branch
      %152 = sbr.rel (0) target = $region109
    $region108: #{tpu_custom_call.1} parent=1 // pred_region
      %154 = dma.done [#allocation10], 1280
    $region109: #{tpu_custom_call.1} parent=1 // pred_fallthru
      _
    // Predicated region
    $region110: #{tpu_custom_call.1} parent=1 // pred_check
      _
    $region111: #{tpu_custom_call.1} parent=1 // pred_check_branch
      %156 = sbr.rel (0) target = $region113
    $region112: #{tpu_custom_call.1} parent=1 // pred_region
      %158 = dma.done [#allocation10], 16
    $region113: #{tpu_custom_call.1} parent=1 // pred_fallthru
      _
    // Predicated region
    $region114: #{tpu_custom_call.1} parent=1 // pred_check
      _
    $region115: #{tpu_custom_call.1} parent=1 // pred_check_branch
      %160 = sbr.rel (0) target = $region117
    $region116: #{tpu_custom_call.1} parent=1 // pred_region
      %162 = dma.done [#allocation5], 16
    $region117: #{tpu_custom_call.1} parent=1 // pred_fallthru
      _
    %163 = sfence
    %v165 = vld [vmem:[%s0] sm:$0xf]
    %v166 = vld [vmem:[%s0 + $0x4] sm:$0xf]
    %v167 = vld [vmem:[%s0 + $0x8] sm:$0xf]
    %v168 = vld [vmem:[%s0 + $0xc] sm:$0xf]
    %v169 = vld [vmem:[%s0 + $0x10] sm:$0xf]
    %v170 = vld [vmem:[%s0 + $0x14] sm:$0xf]
    %v171 = vld [vmem:[%s0 + $0x18] sm:$0xf]
    %v172 = vld [vmem:[%s0 + $0x1c] sm:$0xf]
    %v173 = vld [vmem:[%s0 + $0x20] sm:$0xf]
    %v174 = vld [vmem:[%s0 + $0x24] sm:$0xf]
    %v175 = vld [vmem:[%s0 + $0x28] sm:$0xf]
    %v176 = vld [vmem:[%s0 + $0x2c] sm:$0xf]
    %v177 = vld [vmem:[%s0 + $0x30] sm:$0xf]
    %v178 = vld [vmem:[%s0 + $0x34] sm:$0xf]
    %v179 = vld [vmem:[%s0 + $0x38] sm:$0xf]
    %v180 = vld [vmem:[%s0 + $0x3c] sm:$0xf]
    %v181 = vld [vmem:[%s1] sm:$0xf]
    %v182 = vld [vmem:[%s1 + $0x4] sm:$0xf]
    %v183 = vld [vmem:[%s1 + $0x8] sm:$0xf]
    %v184 = vld [vmem:[%s1 + $0xc] sm:$0xf]
    %v185 = vld [vmem:[%s1 + $0x10] sm:$0x3]
    %v186 = vld [vmem:[%s2] sm:$0x1]
    %v188 = vperm.slane %v186, 0
    %v206 = vunpack.c.l.b16 %v165
    %v207 = vunpack.c.l.b16 %v166
    %v208 = vunpack.c.l.b16 %v167
    %v209 = vunpack.c.l.b16 %v168
    %v210 = vunpack.c.l.b16 %v169
    %v211 = vunpack.c.l.b16 %v170
    %v212 = vunpack.c.l.b16 %v171
    %v213 = vunpack.c.l.b16 %v172
    %v214 = vunpack.c.l.b16 %v173
    %v215 = vunpack.c.l.b16 %v174
    %v216 = vunpack.c.l.b16 %v175
    %v217 = vunpack.c.l.b16 %v176
    %v218 = vunpack.c.l.b16 %v177
    %v219 = vunpack.c.l.b16 %v178
    %v220 = vunpack.c.l.b16 %v179
    %v221 = vunpack.c.l.b16 %v180
    %v222 = vpack.c.b16 %v207, %v206
    %v223 = vpack.c.b16 %v209, %v208
    %v224 = vpack.c.b16 %v211, %v210
    %v225 = vpack.c.b16 %v213, %v212
    %v226 = vpack.c.b16 %v215, %v214
    %v227 = vpack.c.b16 %v217, %v216
    %v228 = vpack.c.b16 %v219, %v218
    %v229 = vpack.c.b16 %v221, %v220
    %v235 = vunpack.c.l.b16 %v181
    %v236 = vunpack.c.l.b16 %v182
    %v237 = vunpack.c.l.b16 %v183
    %v238 = vunpack.c.l.b16 %v184
    %v239 = vunpack.c.l.b16 %v185
    %v240 = vpack.c.b16 %v236, %v235
    %v241 = vpack.c.b16 %v238, %v237
    %v242 = vpack.c.b16 %v239, %v239
    %vm245 = vcmask 293888
    %v247 = vsel %vm245, %v222, 0
    %v250 = vsel %vm245, %v223, 0
    %v253 = vsel %vm245, %v224, 0
    %v256 = vsel %vm245, %v225, 0
    %v259 = vsel %vm245, %v226, 0
    %v262 = vsel %vm245, %v227, 0
    %v265 = vsel %vm245, %v228, 0
    %v268 = vsel %vm245, %v229, 0
    %vm270 = vcmask 1041408
    %v272 = vsel %vm270, %v242, 0
    %274 = vmatpush.bf16.msra.mxu0 0
    %275 = vmatpush.bf16.msra.mxu0 0
    %276 = vmatpush.bf16.msra.mxu0 0
    %277 = vmatpush.bf16.msra.mxu0 0
    %278 = vmatpush.bf16.msra.mxu0 0
    %279 = vmatpush.bf16.msra.mxu0 %v272
    %280 = vmatpush.bf16.msra.mxu0 %v241
    %281 = vmatpush.bf16.msra.mxu0 %v240
    %282 = vmatmul.bf16.gmra.mxu0 %v247
    %v283 = vpop.f32.mrf.mxu0
    %v284 = vadd.f32 %v188, %v283
    %v285 = vpop.f32.mrf.mxu0
    %v286 = vadd.f32 %v188, %v285
    %287 = vmatmul.bf16.gmra.mxu0 %v250
    %v288 = vpop.f32.mrf.mxu0
    %v289 = vadd.f32 %v188, %v288
    %v290 = vpop.f32.mrf.mxu0
    %v291 = vadd.f32 %v188, %v290
    %292 = vmatmul.bf16.gmra.mxu0 %v253
    %v293 = vpop.f32.mrf.mxu0
    %v294 = vadd.f32 %v188, %v293
    %v295 = vpop.f32.mrf.mxu0
    %v296 = vadd.f32 %v188, %v295
    %297 = vmatmul.bf16.gmra.mxu0 %v256
    %v298 = vpop.f32.mrf.mxu0
    %v299 = vadd.f32 %v188, %v298
    %v300 = vpop.f32.mrf.mxu0
    %v301 = vadd.f32 %v188, %v300
    %302 = vmatmul.bf16.gmra.mxu0 %v259
    %v303 = vpop.f32.mrf.mxu0
    %v304 = vadd.f32 %v188, %v303
    %v305 = vpop.f32.mrf.mxu0
    %v306 = vadd.f32 %v188, %v305
    %307 = vmatmul.bf16.gmra.mxu0 %v262
    %v308 = vpop.f32.mrf.mxu0
    %v309 = vadd.f32 %v188, %v308
    %v310 = vpop.f32.mrf.mxu0
    %v311 = vadd.f32 %v188, %v310
    %312 = vmatmul.bf16.gmra.mxu0 %v265
    %v313 = vpop.f32.mrf.mxu0
    %v314 = vadd.f32 %v188, %v313
    %v315 = vpop.f32.mrf.mxu0
    %v316 = vadd.f32 %v188, %v315
    %317 = vmatmul.bf16.gmra.mxu0 %v268
    %v318 = vpop.f32.mrf.mxu0
    %v319 = vadd.f32 %v188, %v318
    %v320 = vpop.f32.mrf.mxu0
    %v321 = vadd.f32 %v188, %v320
    %322 = vdwg.mxu0
    %v323 = vmax.f32 %v284, 0.0
    %v324 = vmax.f32 %v286, 0.0
    %v325 = vmax.f32 %v289, 0.0
    %v326 = vmax.f32 %v291, 0.0
    %v327 = vmax.f32 %v294, 0.0
    %v328 = vmax.f32 %v296, 0.0
    %v329 = vmax.f32 %v299, 0.0
    %v330 = vmax.f32 %v301, 0.0
    %v331 = vmax.f32 %v304, 0.0
    %v332 = vmax.f32 %v306, 0.0
    %v333 = vmax.f32 %v309, 0.0
    %v334 = vmax.f32 %v311, 0.0
    %v335 = vmax.f32 %v314, 0.0
    %v336 = vmax.f32 %v316, 0.0
    %v337 = vmax.f32 %v319, 0.0
    %v338 = vmax.f32 %v321, 0.0
    %v339 = vld [vmem:[%s3] sm:$0x1]
    %s340 = sld [smem:[#allocation12]]
    %v342 = vperm.slane %v339, 0
    %v344 = vmul.f32 %v323, %v342
    %v345 = vmul.f32 %v324, %v342
    %v346 = vmul.f32 %v325, %v342
    %v347 = vmul.f32 %v326, %v342
    %v348 = vmul.f32 %v327, %v342
    %v349 = vmul.f32 %v328, %v342
    %v350 = vmul.f32 %v329, %v342
    %v351 = vmul.f32 %v330, %v342
    %v352 = vmul.f32 %v331, %v342
    %v353 = vmul.f32 %v332, %v342
    %v354 = vmul.f32 %v333, %v342
    %v355 = vmul.f32 %v334, %v342
    %v356 = vmul.f32 %v335, %v342
    %v357 = vmul.f32 %v336, %v342
    %v358 = vmul.f32 %v337, %v342
    %v359 = vmul.f32 %v338, %v342
    %vm360 = vcmask 261120
    %v361 = vsel %vm360, %v344, 0.0
    %362 = vadd.xlane.f32.xlu0 %v361
    %v363 = vpop.xlane.xlu0 %362
    %v364 = vsel %vm360, %v345, 0.0
    %365 = vadd.xlane.f32.xlu0 %v364
    %v366 = vpop.xlane.xlu0 %365
    %v367 = vsel %vm360, %v346, 0.0
    %368 = vadd.xlane.f32.xlu0 %v367
    %v369 = vpop.xlane.xlu0 %368
    %v370 = vsel %vm360, %v347, 0.0
    %371 = vadd.xlane.f32.xlu0 %v370
    %v372 = vpop.xlane.xlu0 %371
    %v373 = vsel %vm360, %v348, 0.0
    %374 = vadd.xlane.f32.xlu0 %v373
    %v375 = vpop.xlane.xlu0 %374
    %v376 = vsel %vm360, %v349, 0.0
    %377 = vadd.xlane.f32.xlu0 %v376
    %v378 = vpop.xlane.xlu0 %377
    %v379 = vsel %vm360, %v350, 0.0
    %380 = vadd.xlane.f32.xlu0 %v379
    %v381 = vpop.xlane.xlu0 %380
    %v382 = vsel %vm360, %v351, 0.0
    %383 = vadd.xlane.f32.xlu0 %v382
    %v384 = vpop.xlane.xlu0 %383
    %v385 = vsel %vm360, %v352, 0.0
    %386 = vadd.xlane.f32.xlu0 %v385
    %v387 = vpop.xlane.xlu0 %386
    %v388 = vsel %vm360, %v353, 0.0
    %389 = vadd.xlane.f32.xlu0 %v388
    %v390 = vpop.xlane.xlu0 %389
    %v391 = vsel %vm360, %v354, 0.0
    %392 = vadd.xlane.f32.xlu0 %v391
    %v393 = vpop.xlane.xlu0 %392
    %v394 = vsel %vm360, %v355, 0.0
    %395 = vadd.xlane.f32.xlu0 %v394
    %v396 = vpop.xlane.xlu0 %395
    %v397 = vsel %vm360, %v356, 0.0
    %398 = vadd.xlane.f32.xlu0 %v397
    %v399 = vpop.xlane.xlu0 %398
    %v400 = vsel %vm360, %v357, 0.0
    %401 = vadd.xlane.f32.xlu0 %v400
    %v402 = vpop.xlane.xlu0 %401
    %v403 = vsel %vm360, %v358, 0.0
    %404 = vadd.xlane.f32.xlu0 %v403
    %v405 = vpop.xlane.xlu0 %404
    %v406 = vsel %vm360, %v359, 0.0
    %407 = vadd.xlane.f32.xlu0 %v406
    %v408 = vpop.xlane.xlu0 %407
    %v409 = vstv %s340
    %v410 = vadd.f32 %v363, %v409
    %v411 = vadd.f32 %v366, %v409
    %v412 = vadd.f32 %v369, %v409
    %v413 = vadd.f32 %v372, %v409
    %v414 = vadd.f32 %v375, %v409
    %v415 = vadd.f32 %v378, %v409
    %v416 = vadd.f32 %v381, %v409
    %v417 = vadd.f32 %v384, %v409
    %v418 = vadd.f32 %v387, %v409
    %v419 = vadd.f32 %v390, %v409
    %v420 = vadd.f32 %v393, %v409
    %v421 = vadd.f32 %v396, %v409
    %v422 = vadd.f32 %v399, %v409
    %v423 = vadd.f32 %v402, %v409
    %v424 = vadd.f32 %v405, %v409
    %v425 = vadd.f32 %v408, %v409
    %v426 = vsub.f32 0.0, %v410
    %v427 = vsub.f32 0.0, %v411
    %v428 = vsub.f32 0.0, %v412
    %v429 = vsub.f32 0.0, %v413
    %v430 = vsub.f32 0.0, %v414
    %v431 = vsub.f32 0.0, %v415
    %v432 = vsub.f32 0.0, %v416
    %v433 = vsub.f32 0.0, %v417
    %v434 = vsub.f32 0.0, %v418
    %v435 = vsub.f32 0.0, %v419
    %v436 = vsub.f32 0.0, %v420
    %v437 = vsub.f32 0.0, %v421
    %v438 = vsub.f32 0.0, %v422
    %v439 = vsub.f32 0.0, %v423
    %v440 = vsub.f32 0.0, %v424
    %v441 = vsub.f32 0.0, %v425
    %v442 = vmul.f32 %v426, 1.442695
    %v443 = vpow.pop %v442
    %v444 = vmul.f32 %v427, 1.442695
    %v445 = vpow.pop %v444
    %v446 = vmul.f32 %v428, 1.442695
    %v447 = vpow.pop %v446
    %v448 = vmul.f32 %v429, 1.442695
    %v449 = vpow.pop %v448
    %v450 = vmul.f32 %v430, 1.442695
    %v451 = vpow.pop %v450
    %v452 = vmul.f32 %v431, 1.442695
    %v453 = vpow.pop %v452
    %v454 = vmul.f32 %v432, 1.442695
    %v455 = vpow.pop %v454
    %v456 = vmul.f32 %v433, 1.442695
    %v457 = vpow.pop %v456
    %v458 = vmul.f32 %v434, 1.442695
    %v459 = vpow.pop %v458
    %v460 = vmul.f32 %v435, 1.442695
    %v461 = vpow.pop %v460
    %v462 = vmul.f32 %v436, 1.442695
    %v463 = vpow.pop %v462
    %v464 = vmul.f32 %v437, 1.442695
    %v465 = vpow.pop %v464
    %v466 = vmul.f32 %v438, 1.442695
    %v467 = vpow.pop %v466
    %v468 = vmul.f32 %v439, 1.442695
    %v469 = vpow.pop %v468
    %v470 = vmul.f32 %v440, 1.442695
    %v471 = vpow.pop %v470
    %v472 = vmul.f32 %v441, 1.442695
    %v473 = vpow.pop %v472
    %v474 = vadd.f32 %v443, 1.0
    %v475 = vadd.f32 %v445, 1.0
    %v476 = vadd.f32 %v447, 1.0
    %v477 = vadd.f32 %v449, 1.0
    %v478 = vadd.f32 %v451, 1.0
    %v479 = vadd.f32 %v453, 1.0
    %v480 = vadd.f32 %v455, 1.0
    %v481 = vadd.f32 %v457, 1.0
    %v482 = vadd.f32 %v459, 1.0
    %v483 = vadd.f32 %v461, 1.0
    %v484 = vadd.f32 %v463, 1.0
    %v485 = vadd.f32 %v465, 1.0
    %v486 = vadd.f32 %v467, 1.0
    %v487 = vadd.f32 %v469, 1.0
    %v488 = vadd.f32 %v471, 1.0
    %v489 = vadd.f32 %v473, 1.0
    %v490 = vrcp.pop %v474
    %v491 = vrcp.pop %v475
    %v492 = vrcp.pop %v476
    %v493 = vrcp.pop %v477
    %v494 = vrcp.pop %v478
    %v495 = vrcp.pop %v479
    %v496 = vrcp.pop %v480
    %v497 = vrcp.pop %v481
    %v498 = vrcp.pop %v482
    %v499 = vrcp.pop %v483
    %v500 = vrcp.pop %v484
    %v501 = vrcp.pop %v485
    %v502 = vrcp.pop %v486
    %v503 = vrcp.pop %v487
    %v504 = vrcp.pop %v488
    %v505 = vrcp.pop %v489
    %v506 = vmul.f32 %v323, %v490
    %v507 = vmul.f32 %v324, %v491
    %v508 = vmul.f32 %v325, %v492
    %v509 = vmul.f32 %v326, %v493
    %v510 = vmul.f32 %v327, %v494
    %v511 = vmul.f32 %v328, %v495
    %v512 = vmul.f32 %v329, %v496
    %v513 = vmul.f32 %v330, %v497
    %v514 = vmul.f32 %v331, %v498
    %v515 = vmul.f32 %v332, %v499
    %v516 = vmul.f32 %v333, %v500
    %v517 = vmul.f32 %v334, %v501
    %v518 = vmul.f32 %v335, %v502
    %v519 = vmul.f32 %v336, %v503
    %v520 = vmul.f32 %v337, %v504
    %v521 = vmul.f32 %v338, %v505
    %v522 = vadd.f32 %v323, %v506
    %v523 = vadd.f32 %v324, %v507
    %v524 = vadd.f32 %v325, %v508
    %v525 = vadd.f32 %v326, %v509
    %v526 = vadd.f32 %v327, %v510
    %v527 = vadd.f32 %v328, %v511
    %v528 = vadd.f32 %v329, %v512
    %v529 = vadd.f32 %v330, %v513
    %v530 = vadd.f32 %v331, %v514
    %v531 = vadd.f32 %v332, %v515
    %v532 = vadd.f32 %v333, %v516
    %v533 = vadd.f32 %v334, %v517
    %v534 = vadd.f32 %v335, %v518
    %v535 = vadd.f32 %v336, %v519
    %v536 = vadd.f32 %v337, %v520
    %v537 = vadd.f32 %v338, %v521
    %s538 = sld [smem:[#allocation12 + $0x1]]
    %v539 = vpack.c.bf16 %v523, %v522
    %v540 = vpack.c.bf16 %v525, %v524
    %v541 = vpack.c.bf16 %v527, %v526
    %v542 = vpack.c.bf16 %v529, %v528
    %v543 = vpack.c.bf16 %v531, %v530
    %v544 = vpack.c.bf16 %v533, %v532
    %v545 = vpack.c.bf16 %v535, %v534
    %v546 = vpack.c.bf16 %v537, %v536
    %v547 = vld [vmem:[#allocation6] sm:$0xff]
    %v548 = vld [vmem:[#allocation6 + $0x8] sm:$0xf]
    %v549 = vld [vmem:[#allocation6 + $0xc] sm:$0xff]
    %v550 = vld [vmem:[#allocation6 + $0x14] sm:$0xf]
    %v551 = vld [vmem:[#allocation6 + $0x18] sm:$0xff]
    %v552 = vld [vmem:[#allocation6 + $0x20] sm:$0xf]
    %v553 = vld [vmem:[#allocation6 + $0x24] sm:$0xff]
    %v554 = vld [vmem:[#allocation6 + $0x2c] sm:$0xf]
    %v563 = vunpack.c.l.b16 %v547
    %v564 = vunpack.c.h.b16 %v547
    %v565 = vunpack.c.l.b16 %v548
    %v566 = vunpack.c.l.b16 %v549
    %v567 = vunpack.c.h.b16 %v549
    %v568 = vunpack.c.l.b16 %v550
    %v569 = vunpack.c.l.b16 %v551
    %v570 = vunpack.c.h.b16 %v551
    %v571 = vunpack.c.l.b16 %v552
    %v572 = vunpack.c.l.b16 %v553
    %v573 = vunpack.c.h.b16 %v553
    %v574 = vunpack.c.l.b16 %v554
    %v575 = vpack.c.b16 %v566, %v563
    %v576 = vpack.c.b16 %v567, %v564
    %v577 = vpack.c.b16 %v568, %v565
    %v578 = vpack.c.b16 %v572, %v569
    %v579 = vpack.c.b16 %v573, %v570
    %v580 = vpack.c.b16 %v574, %v571
    %v588 = vsel %vm360, %v539, 0
    %v591 = vsel %vm360, %v540, 0
    %v594 = vsel %vm360, %v541, 0
    %v597 = vsel %vm360, %v542, 0
    %v600 = vsel %vm360, %v543, 0
    %v603 = vsel %vm360, %v544, 0
    %v606 = vsel %vm360, %v545, 0
    %v609 = vsel %vm360, %v546, 0
    %611 = vmatpush.bf16.msra.mxu0 0
    %612 = vmatpush.bf16.msra.mxu0 0
    %613 = vmatpush.bf16.msra.mxu0 0
    %614 = vmatpush.bf16.msra.mxu0 0
    %615 = vmatpush.bf16.msra.mxu0 0
    %616 = vmatpush.bf16.msra.mxu0 0
    %617 = vmatpush.bf16.msra.mxu0 %v578
    %618 = vmatpush.bf16.msra.mxu0 %v575
    %619 = vmatmul.bf16.gmra.mxu0 %v588
    %v620 = vpop.f32.mrf.mxu0
    %v621 = vadd.f32 0.0, %v620
    %v622 = vpop.f32.mrf.mxu0
    %v623 = vadd.f32 0.0, %v622
    %624 = vmatmul.bf16.gmra.mxu0 %v591
    %v625 = vpop.f32.mrf.mxu0
    %v626 = vadd.f32 0.0, %v625
    %v627 = vpop.f32.mrf.mxu0
    %v628 = vadd.f32 0.0, %v627
    %629 = vmatmul.bf16.gmra.mxu0 %v594
    %v630 = vpop.f32.mrf.mxu0
    %v631 = vadd.f32 0.0, %v630
    %v632 = vpop.f32.mrf.mxu0
    %v633 = vadd.f32 0.0, %v632
    %634 = vmatmul.bf16.gmra.mxu0 %v597
    %v635 = vpop.f32.mrf.mxu0
    %v636 = vadd.f32 0.0, %v635
    %v637 = vpop.f32.mrf.mxu0
    %v638 = vadd.f32 0.0, %v637
    %639 = vmatmul.bf16.gmra.mxu0 %v600
    %v640 = vpop.f32.mrf.mxu0
    %v641 = vadd.f32 0.0, %v640
    %v642 = vpop.f32.mrf.mxu0
    %v643 = vadd.f32 0.0, %v642
    %644 = vmatmul.bf16.gmra.mxu0 %v603
    %v645 = vpop.f32.mrf.mxu0
    %v646 = vadd.f32 0.0, %v645
    %v647 = vpop.f32.mrf.mxu0
    %v648 = vadd.f32 0.0, %v647
    %649 = vmatmul.bf16.gmra.mxu0 %v606
    %v650 = vpop.f32.mrf.mxu0
    %v651 = vadd.f32 0.0, %v650
    %v652 = vpop.f32.mrf.mxu0
    %v653 = vadd.f32 0.0, %v652
    %654 = vmatmul.bf16.gmra.mxu0 %v609
    %v655 = vpop.f32.mrf.mxu0
    %v656 = vadd.f32 0.0, %v655
    %v657 = vpop.f32.mrf.mxu0
    %v658 = vadd.f32 0.0, %v657
    %659 = vdwg.mxu0
    %660 = vmatpush.bf16.msra.mxu0 0
    %661 = vmatpush.bf16.msra.mxu0 0
    %662 = vmatpush.bf16.msra.mxu0 0
    %663 = vmatpush.bf16.msra.mxu0 0
    %664 = vmatpush.bf16.msra.mxu0 0
    %665 = vmatpush.bf16.msra.mxu0 0
    %666 = vmatpush.bf16.msra.mxu0 %v579
    %667 = vmatpush.bf16.msra.mxu0 %v576
    %668 = vmatmul.bf16.gmra.mxu0 %v588
    %v669 = vpop.f32.mrf.mxu0
    %v670 = vadd.f32 0.0, %v669
    %v671 = vpop.f32.mrf.mxu0
    %v672 = vadd.f32 0.0, %v671
    %673 = vmatmul.bf16.gmra.mxu0 %v591
    %v674 = vpop.f32.mrf.mxu0
    %v675 = vadd.f32 0.0, %v674
    %v676 = vpop.f32.mrf.mxu0
    %v677 = vadd.f32 0.0, %v676
    %678 = vmatmul.bf16.gmra.mxu0 %v594
    %v679 = vpop.f32.mrf.mxu0
    %v680 = vadd.f32 0.0, %v679
    %v681 = vpop.f32.mrf.mxu0
    %v682 = vadd.f32 0.0, %v681
    %683 = vmatmul.bf16.gmra.mxu0 %v597
    %v684 = vpop.f32.mrf.mxu0
    %v685 = vadd.f32 0.0, %v684
    %v686 = vpop.f32.mrf.mxu0
    %v687 = vadd.f32 0.0, %v686
    %688 = vmatmul.bf16.gmra.mxu0 %v600
    %v689 = vpop.f32.mrf.mxu0
    %v690 = vadd.f32 0.0, %v689
    %v691 = vpop.f32.mrf.mxu0
    %v692 = vadd.f32 0.0, %v691
    %693 = vmatmul.bf16.gmra.mxu0 %v603
    %v694 = vpop.f32.mrf.mxu0
    %v695 = vadd.f32 0.0, %v694
    %v696 = vpop.f32.mrf.mxu0
    %v697 = vadd.f32 0.0, %v696
    %698 = vmatmul.bf16.gmra.mxu0 %v606
    %v699 = vpop.f32.mrf.mxu0
    %v700 = vadd.f32 0.0, %v699
    %v701 = vpop.f32.mrf.mxu0
    %v702 = vadd.f32 0.0, %v701
    %703 = vmatmul.bf16.gmra.mxu0 %v609
    %v704 = vpop.f32.mrf.mxu0
    %v705 = vadd.f32 0.0, %v704
    %v706 = vpop.f32.mrf.mxu0
    %v707 = vadd.f32 0.0, %v706
    %708 = vdwg.mxu0
    %709 = vmatpush.bf16.msra.mxu0 0
    %710 = vmatpush.bf16.msra.mxu0 0
    %711 = vmatpush.bf16.msra.mxu0 0
    %712 = vmatpush.bf16.msra.mxu0 0
    %713 = vmatpush.bf16.msra.mxu0 0
    %714 = vmatpush.bf16.msra.mxu0 0
    %715 = vmatpush.bf16.msra.mxu0 %v580
    %716 = vmatpush.bf16.msra.mxu0 %v577
    %717 = vmatmul.bf16.gmra.mxu0 %v588
    %v718 = vpop.f32.mrf.mxu0
    %v719 = vadd.f32 0.0, %v718
    %v720 = vpop.f32.mrf.mxu0
    %v721 = vadd.f32 0.0, %v720
    %722 = vmatmul.bf16.gmra.mxu0 %v591
    %v723 = vpop.f32.mrf.mxu0
    %v724 = vadd.f32 0.0, %v723
    %v725 = vpop.f32.mrf.mxu0
    %v726 = vadd.f32 0.0, %v725
    %727 = vmatmul.bf16.gmra.mxu0 %v594
    %v728 = vpop.f32.mrf.mxu0
    %v729 = vadd.f32 0.0, %v728
    %v730 = vpop.f32.mrf.mxu0
    %v731 = vadd.f32 0.0, %v730
    %732 = vmatmul.bf16.gmra.mxu0 %v597
    %v733 = vpop.f32.mrf.mxu0
    %v734 = vadd.f32 0.0, %v733
    %v735 = vpop.f32.mrf.mxu0
    %v736 = vadd.f32 0.0, %v735
    %737 = vmatmul.bf16.gmra.mxu0 %v600
    %v738 = vpop.f32.mrf.mxu0
    %v739 = vadd.f32 0.0, %v738
    %v740 = vpop.f32.mrf.mxu0
    %v741 = vadd.f32 0.0, %v740
    %742 = vmatmul.bf16.gmra.mxu0 %v603
    %v743 = vpop.f32.mrf.mxu0
    %v744 = vadd.f32 0.0, %v743
    %v745 = vpop.f32.mrf.mxu0
    %v746 = vadd.f32 0.0, %v745
    %747 = vmatmul.bf16.gmra.mxu0 %v606
    %v748 = vpop.f32.mrf.mxu0
    %v749 = vadd.f32 0.0, %v748
    %v750 = vpop.f32.mrf.mxu0
    %v751 = vadd.f32 0.0, %v750
    %752 = vmatmul.bf16.gmra.mxu0 %v609
    %v753 = vpop.f32.mrf.mxu0
    %v754 = vadd.f32 0.0, %v753
    %v755 = vpop.f32.mrf.mxu0
    %v756 = vadd.f32 0.0, %v755
    %757 = vdwg.mxu0
    %v758 = vpack.c.bf16 %v670, %v621
    %v759 = vpack.c.bf16 %v719, %v719
    %v760 = vpack.c.bf16 %v672, %v623
    %v761 = vpack.c.bf16 %v721, %v721
    %v762 = vpack.c.bf16 %v675, %v626
    %v763 = vpack.c.bf16 %v724, %v724
    %v764 = vpack.c.bf16 %v677, %v628
    %v765 = vpack.c.bf16 %v726, %v726
    %v766 = vpack.c.bf16 %v680, %v631
    %v767 = vpack.c.bf16 %v729, %v729
    %v768 = vpack.c.bf16 %v682, %v633
    %v769 = vpack.c.bf16 %v731, %v731
    %v770 = vpack.c.bf16 %v685, %v636
    %v771 = vpack.c.bf16 %v734, %v734
    %v772 = vpack.c.bf16 %v687, %v638
    %v773 = vpack.c.bf16 %v736, %v736
    %v774 = vpack.c.bf16 %v690, %v641
    %v775 = vpack.c.bf16 %v739, %v739
    %v776 = vpack.c.bf16 %v692, %v643
    %v777 = vpack.c.bf16 %v741, %v741
    %v778 = vpack.c.bf16 %v695, %v646
    %v779 = vpack.c.bf16 %v744, %v744
    %v780 = vpack.c.bf16 %v697, %v648
    %v781 = vpack.c.bf16 %v746, %v746
    %v782 = vpack.c.bf16 %v700, %v651
    %v783 = vpack.c.bf16 %v749, %v749
    %v784 = vpack.c.bf16 %v702, %v653
    %v785 = vpack.c.bf16 %v751, %v751
    %v786 = vpack.c.bf16 %v705, %v656
    %v787 = vpack.c.bf16 %v754, %v754
    %v788 = vpack.c.bf16 %v707, %v658
    %v789 = vpack.c.bf16 %v756, %v756
    %v790 = vld [vmem:[#allocation2] sm:$0xf]
    %v791 = vld [vmem:[#allocation2 + $0x4] sm:$0xf]
    %v792 = vld [vmem:[#allocation2 + $0x8] sm:$0xf]
    %v793 = vld [vmem:[#allocation2 + $0xc] sm:$0xf]
    %s794 = scalar_lea.vmem [#allocation2], 16
    %v795 = vld [vmem:[%s794] sm:$0xf]
    %v796 = vld [vmem:[%s794 + $0x4] sm:$0xf]
    %v797 = vld [vmem:[%s794 + $0x8] sm:$0xf]
    %v798 = vld [vmem:[%s794 + $0xc] sm:$0xf]
    %v803 = vunpack.c.l.b16 %v795
    %v804 = vunpack.c.l.b16 %v796
    %v805 = vunpack.c.l.b16 %v797
    %v806 = vunpack.c.l.b16 %v798
    %v807 = vpack.c.b16 %v804, %v803
    %v808 = vpack.c.b16 %v806, %v805
    %v827 = vunpack.c.l.b16 %v758
    %v828 = vunpack.c.l.b16 %v760
    %v829 = vunpack.c.l.b16 %v762
    %v830 = vunpack.c.l.b16 %v764
    %v831 = vunpack.c.l.b16 %v766
    %v832 = vunpack.c.l.b16 %v768
    %v833 = vunpack.c.l.b16 %v770
    %v834 = vunpack.c.l.b16 %v772
    %v835 = vunpack.c.l.b16 %v774
    %v836 = vunpack.c.l.b16 %v776
    %v837 = vunpack.c.l.b16 %v778
    %v838 = vunpack.c.l.b16 %v780
    %v839 = vunpack.c.l.b16 %v782
    %v840 = vunpack.c.l.b16 %v784
    %v841 = vunpack.c.l.b16 %v786
    %v842 = vunpack.c.l.b16 %v788
    %v843 = vpack.c.b16 %v828, %v827
    %v844 = vpack.c.b16 %v830, %v829
    %v845 = vpack.c.b16 %v832, %v831
    %v846 = vpack.c.b16 %v834, %v833
    %v847 = vpack.c.b16 %v836, %v835
    %v848 = vpack.c.b16 %v838, %v837
    %v849 = vpack.c.b16 %v840, %v839
    %v850 = vpack.c.b16 %v842, %v841
    %851 = vrot.lane.b32.xlu0 %v843, 96
    %v852 = vpop.permute.xlu0 %851
    %853 = vrot.lane.b32.xlu0 %v844, 96
    %v854 = vpop.permute.xlu0 %853
    %855 = vrot.lane.b32.xlu0 %v845, 96
    %v856 = vpop.permute.xlu0 %855
    %857 = vrot.lane.b32.xlu0 %v846, 96
    %v858 = vpop.permute.xlu0 %857
    %859 = vrot.lane.b32.xlu0 %v847, 96
    %v860 = vpop.permute.xlu0 %859
    %861 = vrot.lane.b32.xlu0 %v848, 96
    %v862 = vpop.permute.xlu0 %861
    %863 = vrot.lane.b32.xlu0 %v849, 96
    %v864 = vpop.permute.xlu0 %863
    %865 = vrot.lane.b32.xlu0 %v850, 96
    %v866 = vpop.permute.xlu0 %865
    %875 = vmatpush.bf16.msra.mxu0 %v866
    %876 = vmatpush.bf16.msra.mxu0 %v864
    %877 = vmatpush.bf16.msra.mxu0 %v862
    %878 = vmatpush.bf16.msra.mxu0 %v860
    %879 = vmatpush.bf16.msra.mxu0 %v858
    %880 = vmatpush.bf16.msra.mxu0 %v856
    %881 = vmatpush.bf16.msra.mxu0 %v854
    %882 = vmatpush.bf16.msra.mxu0 %v852
    %883 = vmatmul.bf16.gmra.mxu0 %v807
    %v884 = vpop.f32.mrf.mxu0
    %v885 = vadd.f32 0.0, %v884
    %v886 = vpop.f32.mrf.mxu0
    %v887 = vadd.f32 0.0, %v886
    %888 = vmatmul.bf16.gmra.mxu0 %v808
    %v889 = vpop.f32.mrf.mxu0
    %v890 = vadd.f32 0.0, %v889
    %v891 = vpop.f32.mrf.mxu0
    %v892 = vadd.f32 0.0, %v891
    %893 = vdwg.mxu0
    %v898 = vunpack.c.l.b16 %v790
    %v899 = vunpack.c.l.b16 %v791
    %v900 = vunpack.c.l.b16 %v792
    %v901 = vunpack.c.l.b16 %v793
    %v902 = vpack.c.b16 %v899, %v898
    %v903 = vpack.c.b16 %v901, %v900
    %914 = vmatpush.bf16.msra.mxu0 %v850
    %915 = vmatpush.bf16.msra.mxu0 %v849
    %916 = vmatpush.bf16.msra.mxu0 %v848
    %917 = vmatpush.bf16.msra.mxu0 %v847
    %918 = vmatpush.bf16.msra.mxu0 %v846
    %919 = vmatpush.bf16.msra.mxu0 %v845
    %920 = vmatpush.bf16.msra.mxu0 %v844
    %921 = vmatpush.bf16.msra.mxu0 %v843
    %922 = vmatmul.bf16.gmra.mxu0 %v902
    %v923 = vpop.f32.mrf.mxu0
    %v924 = vadd.f32 %v885, %v923
    %v925 = vpop.f32.mrf.mxu0
    %v926 = vadd.f32 %v887, %v925
    %927 = vmatmul.bf16.gmra.mxu0 %v903
    %v928 = vpop.f32.mrf.mxu0
    %v929 = vadd.f32 %v890, %v928
    %v930 = vpop.f32.mrf.mxu0
    %v931 = vadd.f32 %v892, %v930
    %932 = vdwg.mxu0
    %s933 = scalar_lea.vmem [#allocation2], 32
    %v934 = vld [vmem:[%s933] sm:$0xf]
    %v935 = vld [vmem:[%s933 + $0x4] sm:$0xf]
    %v936 = vld [vmem:[%s933 + $0x8] sm:$0xf]
    %v937 = vld [vmem:[%s933 + $0xc] sm:$0xf]
    %v942 = vunpack.c.l.b16 %v934
    %v943 = vunpack.c.l.b16 %v935
    %v944 = vunpack.c.l.b16 %v936
    %v945 = vunpack.c.l.b16 %v937
    %v946 = vpack.c.b16 %v943, %v942
    %v947 = vpack.c.b16 %v945, %v944
    %950 = vrot.lane.b32.xlu0 %v843, 64
    %v951 = vpop.permute.xlu0 %950
    %952 = vrot.lane.b32.xlu0 %v844, 64
    %v953 = vpop.permute.xlu0 %952
    %954 = vrot.lane.b32.xlu0 %v845, 64
    %v955 = vpop.permute.xlu0 %954
    %956 = vrot.lane.b32.xlu0 %v846, 64
    %v957 = vpop.permute.xlu0 %956
    %958 = vrot.lane.b32.xlu0 %v847, 64
    %v959 = vpop.permute.xlu0 %958
    %960 = vrot.lane.b32.xlu0 %v848, 64
    %v961 = vpop.permute.xlu0 %960
    %962 = vrot.lane.b32.xlu0 %v849, 64
    %v963 = vpop.permute.xlu0 %962
    %964 = vrot.lane.b32.xlu0 %v850, 64
    %v965 = vpop.permute.xlu0 %964
    %974 = vmatpush.bf16.msra.mxu0 %v965
    %975 = vmatpush.bf16.msra.mxu0 %v963
    %976 = vmatpush.bf16.msra.mxu0 %v961
    %977 = vmatpush.bf16.msra.mxu0 %v959
    %978 = vmatpush.bf16.msra.mxu0 %v957
    %979 = vmatpush.bf16.msra.mxu0 %v955
    %980 = vmatpush.bf16.msra.mxu0 %v953
    %981 = vmatpush.bf16.msra.mxu0 %v951
    %982 = vmatmul.bf16.gmra.mxu0 %v946
    %v983 = vpop.f32.mrf.mxu0
    %v984 = vadd.f32 0.0, %v983
    %v985 = vpop.f32.mrf.mxu0
    %v986 = vadd.f32 0.0, %v985
    %987 = vmatmul.bf16.gmra.mxu0 %v947
    %v988 = vpop.f32.mrf.mxu0
    %v989 = vadd.f32 0.0, %v988
    %v990 = vpop.f32.mrf.mxu0
    %v991 = vadd.f32 0.0, %v990
    %992 = vdwg.mxu0
    %v993 = vadd.f32 %v924, %v984
    %v994 = vadd.f32 %v926, %v986
    %v995 = vadd.f32 %v929, %v989
    %v996 = vadd.f32 %v931, %v991
    %s997 = scalar_lea.vmem [#allocation2], 48
    %v998 = vld [vmem:[%s997] sm:$0xf]
    %v999 = vld [vmem:[%s997 + $0x4] sm:$0xf]
    %v1000 = vld [vmem:[%s997 + $0x8] sm:$0xf]
    %v1001 = vld [vmem:[%s997 + $0xc] sm:$0xf]
    %v1006 = vunpack.c.l.b16 %v998
    %v1007 = vunpack.c.l.b16 %v999
    %v1008 = vunpack.c.l.b16 %v1000
    %v1009 = vunpack.c.l.b16 %v1001
    %v1010 = vpack.c.b16 %v1007, %v1006
    %v1011 = vpack.c.b16 %v1009, %v1008
    %1014 = vrot.lane.b32.xlu0 %v843, 32
    %v1015 = vpop.permute.xlu0 %1014
    %1016 = vrot.lane.b32.xlu0 %v844, 32
    %v1017 = vpop.permute.xlu0 %1016
    %1018 = vrot.lane.b32.xlu0 %v845, 32
    %v1019 = vpop.permute.xlu0 %1018
    %1020 = vrot.lane.b32.xlu0 %v846, 32
    %v1021 = vpop.permute.xlu0 %1020
    %1022 = vrot.lane.b32.xlu0 %v847, 32
    %v1023 = vpop.permute.xlu0 %1022
    %1024 = vrot.lane.b32.xlu0 %v848, 32
    %v1025 = vpop.permute.xlu0 %1024
    %1026 = vrot.lane.b32.xlu0 %v849, 32
    %v1027 = vpop.permute.xlu0 %1026
    %1028 = vrot.lane.b32.xlu0 %v850, 32
    %v1029 = vpop.permute.xlu0 %1028
    %1038 = vmatpush.bf16.msra.mxu0 %v1029
    %1039 = vmatpush.bf16.msra.mxu0 %v1027
    %1040 = vmatpush.bf16.msra.mxu0 %v1025
    %1041 = vmatpush.bf16.msra.mxu0 %v1023
    %1042 = vmatpush.bf16.msra.mxu0 %v1021
    %1043 = vmatpush.bf16.msra.mxu0 %v1019
    %1044 = vmatpush.bf16.msra.mxu0 %v1017
    %1045 = vmatpush.bf16.msra.mxu0 %v1015
    %1046 = vmatmul.bf16.gmra.mxu0 %v1010
    %v1047 = vpop.f32.mrf.mxu0
    %v1048 = vadd.f32 0.0, %v1047
    %v1049 = vpop.f32.mrf.mxu0
    %v1050 = vadd.f32 0.0, %v1049
    %1051 = vmatmul.bf16.gmra.mxu0 %v1011
    %v1052 = vpop.f32.mrf.mxu0
    %v1053 = vadd.f32 0.0, %v1052
    %v1054 = vpop.f32.mrf.mxu0
    %v1055 = vadd.f32 0.0, %v1054
    %1056 = vdwg.mxu0
    %v1057 = vadd.f32 %v993, %v1048
    %v1058 = vadd.f32 %v994, %v1050
    %v1059 = vadd.f32 %v995, %v1053
    %v1060 = vadd.f32 %v996, %v1055
    %s1061 = scalar_lea.vmem [#allocation2], 64
    %v1062 = vld [vmem:[%s1061] sm:$0xf]
    %v1063 = vld [vmem:[%s1061 + $0x4] sm:$0xf]
    %v1064 = vld [vmem:[%s1061 + $0x8] sm:$0xf]
    %v1065 = vld [vmem:[%s1061 + $0xc] sm:$0xf]
    %v1070 = vunpack.c.l.b16 %v1062
    %v1071 = vunpack.c.l.b16 %v1063
    %v1072 = vunpack.c.l.b16 %v1064
    %v1073 = vunpack.c.l.b16 %v1065
    %v1074 = vpack.c.b16 %v1071, %v1070
    %v1075 = vpack.c.b16 %v1073, %v1072
    %v1078 = vunpack.c.h.b16 %v758
    %v1079 = vunpack.c.h.b16 %v760
    %v1080 = vunpack.c.h.b16 %v762
    %v1081 = vunpack.c.h.b16 %v764
    %v1082 = vunpack.c.h.b16 %v766
    %v1083 = vunpack.c.h.b16 %v768
    %v1084 = vunpack.c.h.b16 %v770
    %v1085 = vunpack.c.h.b16 %v772
    %v1086 = vunpack.c.h.b16 %v774
    %v1087 = vunpack.c.h.b16 %v776
    %v1088 = vunpack.c.h.b16 %v778
    %v1089 = vunpack.c.h.b16 %v780
    %v1090 = vunpack.c.h.b16 %v782
    %v1091 = vunpack.c.h.b16 %v784
    %v1092 = vunpack.c.h.b16 %v786
    %v1093 = vunpack.c.h.b16 %v788
    %v1094 = vpack.c.b16 %v1079, %v1078
    %v1095 = vpack.c.b16 %v1081, %v1080
    %v1096 = vpack.c.b16 %v1083, %v1082
    %v1097 = vpack.c.b16 %v1085, %v1084
    %v1098 = vpack.c.b16 %v1087, %v1086
    %v1099 = vpack.c.b16 %v1089, %v1088
    %v1100 = vpack.c.b16 %v1091, %v1090
    %v1101 = vpack.c.b16 %v1093, %v1092
    %1110 = vmatpush.bf16.msra.mxu0 %v1101
    %1111 = vmatpush.bf16.msra.mxu0 %v1100
    %1112 = vmatpush.bf16.msra.mxu0 %v1099
    %1113 = vmatpush.bf16.msra.mxu0 %v1098
    %1114 = vmatpush.bf16.msra.mxu0 %v1097
    %1115 = vmatpush.bf16.msra.mxu0 %v1096
    %1116 = vmatpush.bf16.msra.mxu0 %v1095
    %1117 = vmatpush.bf16.msra.mxu0 %v1094
    %1118 = vmatmul.bf16.gmra.mxu0 %v1074
    %v1119 = vpop.f32.mrf.mxu0
    %v1120 = vadd.f32 0.0, %v1119
    %v1121 = vpop.f32.mrf.mxu0
    %v1122 = vadd.f32 0.0, %v1121
    %1123 = vmatmul.bf16.gmra.mxu0 %v1075
    %v1124 = vpop.f32.mrf.mxu0
    %v1125 = vadd.f32 0.0, %v1124
    %v1126 = vpop.f32.mrf.mxu0
    %v1127 = vadd.f32 0.0, %v1126
    %1128 = vdwg.mxu0
    %v1129 = vadd.f32 %v1057, %v1120
    %v1130 = vadd.f32 %v1058, %v1122
    %v1131 = vadd.f32 %v1059, %v1125
    %v1132 = vadd.f32 %v1060, %v1127
    %s1133 = scalar_lea.vmem [#allocation2], 80
    %v1134 = vld [vmem:[%s1133] sm:$0xf]
    %v1135 = vld [vmem:[%s1133 + $0x4] sm:$0xf]
    %v1136 = vld [vmem:[%s1133 + $0x8] sm:$0xf]
    %v1137 = vld [vmem:[%s1133 + $0xc] sm:$0xf]
    %v1142 = vunpack.c.l.b16 %v1134
    %v1143 = vunpack.c.l.b16 %v1135
    %v1144 = vunpack.c.l.b16 %v1136
    %v1145 = vunpack.c.l.b16 %v1137
    %v1146 = vpack.c.b16 %v1143, %v1142
    %v1147 = vpack.c.b16 %v1145, %v1144
    %1150 = vrot.lane.b32.xlu0 %v1094, 96
    %v1151 = vpop.permute.xlu0 %1150
    %1152 = vrot.lane.b32.xlu0 %v1095, 96
    %v1153 = vpop.permute.xlu0 %1152
    %1154 = vrot.lane.b32.xlu0 %v1096, 96
    %v1155 = vpop.permute.xlu0 %1154
    %1156 = vrot.lane.b32.xlu0 %v1097, 96
    %v1157 = vpop.permute.xlu0 %1156
    %1158 = vrot.lane.b32.xlu0 %v1098, 96
    %v1159 = vpop.permute.xlu0 %1158
    %1160 = vrot.lane.b32.xlu0 %v1099, 96
    %v1161 = vpop.permute.xlu0 %1160
    %1162 = vrot.lane.b32.xlu0 %v1100, 96
    %v1163 = vpop.permute.xlu0 %1162
    %1164 = vrot.lane.b32.xlu0 %v1101, 96
    %v1165 = vpop.permute.xlu0 %1164
    %1174 = vmatpush.bf16.msra.mxu0 %v1165
    %1175 = vmatpush.bf16.msra.mxu0 %v1163
    %1176 = vmatpush.bf16.msra.mxu0 %v1161
    %1177 = vmatpush.bf16.msra.mxu0 %v1159
    %1178 = vmatpush.bf16.msra.mxu0 %v1157
    %1179 = vmatpush.bf16.msra.mxu0 %v1155
    %1180 = vmatpush.bf16.msra.mxu0 %v1153
    %1181 = vmatpush.bf16.msra.mxu0 %v1151
    %1182 = vmatmul.bf16.gmra.mxu0 %v1146
    %v1183 = vpop.f32.mrf.mxu0
    %v1184 = vadd.f32 0.0, %v1183
    %v1185 = vpop.f32.mrf.mxu0
    %v1186 = vadd.f32 0.0, %v1185
    %1187 = vmatmul.bf16.gmra.mxu0 %v1147
    %v1188 = vpop.f32.mrf.mxu0
    %v1189 = vadd.f32 0.0, %v1188
    %v1190 = vpop.f32.mrf.mxu0
    %v1191 = vadd.f32 0.0, %v1190
    %1192 = vdwg.mxu0
    %v1193 = vadd.f32 %v1129, %v1184
    %v1194 = vadd.f32 %v1130, %v1186
    %v1195 = vadd.f32 %v1131, %v1189
    %v1196 = vadd.f32 %v1132, %v1191
    %s1197 = scalar_lea.vmem [#allocation2], 96
    %v1198 = vld [vmem:[%s1197] sm:$0xf]
    %v1199 = vld [vmem:[%s1197 + $0x4] sm:$0xf]
    %v1200 = vld [vmem:[%s1197 + $0x8] sm:$0xf]
    %v1201 = vld [vmem:[%s1197 + $0xc] sm:$0xf]
    %v1206 = vunpack.c.l.b16 %v1198
    %v1207 = vunpack.c.l.b16 %v1199
    %v1208 = vunpack.c.l.b16 %v1200
    %v1209 = vunpack.c.l.b16 %v1201
    %v1210 = vpack.c.b16 %v1207, %v1206
    %v1211 = vpack.c.b16 %v1209, %v1208
    %1214 = vrot.lane.b32.xlu0 %v1094, 64
    %v1215 = vpop.permute.xlu0 %1214
    %1216 = vrot.lane.b32.xlu0 %v1095, 64
    %v1217 = vpop.permute.xlu0 %1216
    %1218 = vrot.lane.b32.xlu0 %v1096, 64
    %v1219 = vpop.permute.xlu0 %1218
    %1220 = vrot.lane.b32.xlu0 %v1097, 64
    %v1221 = vpop.permute.xlu0 %1220
    %1222 = vrot.lane.b32.xlu0 %v1098, 64
    %v1223 = vpop.permute.xlu0 %1222
    %1224 = vrot.lane.b32.xlu0 %v1099, 64
    %v1225 = vpop.permute.xlu0 %1224
    %1226 = vrot.lane.b32.xlu0 %v1100, 64
    %v1227 = vpop.permute.xlu0 %1226
    %1228 = vrot.lane.b32.xlu0 %v1101, 64
    %v1229 = vpop.permute.xlu0 %1228
    %1238 = vmatpush.bf16.msra.mxu0 %v1229
    %1239 = vmatpush.bf16.msra.mxu0 %v1227
    %1240 = vmatpush.bf16.msra.mxu0 %v1225
    %1241 = vmatpush.bf16.msra.mxu0 %v1223
    %1242 = vmatpush.bf16.msra.mxu0 %v1221
    %1243 = vmatpush.bf16.msra.mxu0 %v1219
    %1244 = vmatpush.bf16.msra.mxu0 %v1217
    %1245 = vmatpush.bf16.msra.mxu0 %v1215
    %1246 = vmatmul.bf16.gmra.mxu0 %v1210
    %v1247 = vpop.f32.mrf.mxu0
    %v1248 = vadd.f32 0.0, %v1247
    %v1249 = vpop.f32.mrf.mxu0
    %v1250 = vadd.f32 0.0, %v1249
    %1251 = vmatmul.bf16.gmra.mxu0 %v1211
    %v1252 = vpop.f32.mrf.mxu0
    %v1253 = vadd.f32 0.0, %v1252
    %v1254 = vpop.f32.mrf.mxu0
    %v1255 = vadd.f32 0.0, %v1254
    %1256 = vdwg.mxu0
    %v1257 = vadd.f32 %v1193, %v1248
    %v1258 = vadd.f32 %v1194, %v1250
    %v1259 = vadd.f32 %v1195, %v1253
    %v1260 = vadd.f32 %v1196, %v1255
    %s1261 = scalar_lea.vmem [#allocation2], 112
    %v1262 = vld [vmem:[%s1261] sm:$0xf]
    %v1263 = vld [vmem:[%s1261 + $0x4] sm:$0xf]
    %v1264 = vld [vmem:[%s1261 + $0x8] sm:$0xf]
    %v1265 = vld [vmem:[%s1261 + $0xc] sm:$0xf]
    %v1270 = vunpack.c.l.b16 %v1262
    %v1271 = vunpack.c.l.b16 %v1263
    %v1272 = vunpack.c.l.b16 %v1264
    %v1273 = vunpack.c.l.b16 %v1265
    %v1274 = vpack.c.b16 %v1271, %v1270
    %v1275 = vpack.c.b16 %v1273, %v1272
    %1278 = vrot.lane.b32.xlu0 %v1094, 32
    %v1279 = vpop.permute.xlu0 %1278
    %1280 = vrot.lane.b32.xlu0 %v1095, 32
    %v1281 = vpop.permute.xlu0 %1280
    %1282 = vrot.lane.b32.xlu0 %v1096, 32
    %v1283 = vpop.permute.xlu0 %1282
    %1284 = vrot.lane.b32.xlu0 %v1097, 32
    %v1285 = vpop.permute.xlu0 %1284
    %1286 = vrot.lane.b32.xlu0 %v1098, 32
    %v1287 = vpop.permute.xlu0 %1286
    %1288 = vrot.lane.b32.xlu0 %v1099, 32
    %v1289 = vpop.permute.xlu0 %1288
    %1290 = vrot.lane.b32.xlu0 %v1100, 32
    %v1291 = vpop.permute.xlu0 %1290
    %1292 = vrot.lane.b32.xlu0 %v1101, 32
    %v1293 = vpop.permute.xlu0 %1292
    %1302 = vmatpush.bf16.msra.mxu0 %v1293
    %1303 = vmatpush.bf16.msra.mxu0 %v1291
    %1304 = vmatpush.bf16.msra.mxu0 %v1289
    %1305 = vmatpush.bf16.msra.mxu0 %v1287
    %1306 = vmatpush.bf16.msra.mxu0 %v1285
    %1307 = vmatpush.bf16.msra.mxu0 %v1283
    %1308 = vmatpush.bf16.msra.mxu0 %v1281
    %1309 = vmatpush.bf16.msra.mxu0 %v1279
    %1310 = vmatmul.bf16.gmra.mxu0 %v1274
    %v1311 = vpop.f32.mrf.mxu0
    %v1312 = vadd.f32 0.0, %v1311
    %v1313 = vpop.f32.mrf.mxu0
    %v1314 = vadd.f32 0.0, %v1313
    %1315 = vmatmul.bf16.gmra.mxu0 %v1275
    %v1316 = vpop.f32.mrf.mxu0
    %v1317 = vadd.f32 0.0, %v1316
    %v1318 = vpop.f32.mrf.mxu0
    %v1319 = vadd.f32 0.0, %v1318
    %1320 = vdwg.mxu0
    %v1321 = vadd.f32 %v1257, %v1312
    %v1322 = vadd.f32 %v1258, %v1314
    %v1323 = vadd.f32 %v1259, %v1317
    %v1324 = vadd.f32 %v1260, %v1319
    %s1325 = scalar_lea.vmem [#allocation2], 128
    %v1326 = vld [vmem:[%s1325] sm:$0xf]
    %v1327 = vld [vmem:[%s1325 + $0x4] sm:$0xf]
    %v1328 = vld [vmem:[%s1325 + $0x8] sm:$0xf]
    %v1329 = vld [vmem:[%s1325 + $0xc] sm:$0xf]
    %v1334 = vunpack.c.l.b16 %v1326
    %v1335 = vunpack.c.l.b16 %v1327
    %v1336 = vunpack.c.l.b16 %v1328
    %v1337 = vunpack.c.l.b16 %v1329
    %v1338 = vpack.c.b16 %v1335, %v1334
    %v1339 = vpack.c.b16 %v1337, %v1336
    %v1358 = vunpack.c.l.b16 %v759
    %v1359 = vunpack.c.l.b16 %v761
    %v1360 = vunpack.c.l.b16 %v763
    %v1361 = vunpack.c.l.b16 %v765
    %v1362 = vunpack.c.l.b16 %v767
    %v1363 = vunpack.c.l.b16 %v769
    %v1364 = vunpack.c.l.b16 %v771
    %v1365 = vunpack.c.l.b16 %v773
    %v1366 = vunpack.c.l.b16 %v775
    %v1367 = vunpack.c.l.b16 %v777
    %v1368 = vunpack.c.l.b16 %v779
    %v1369 = vunpack.c.l.b16 %v781
    %v1370 = vunpack.c.l.b16 %v783
    %v1371 = vunpack.c.l.b16 %v785
    %v1372 = vunpack.c.l.b16 %v787
    %v1373 = vunpack.c.l.b16 %v789
    %v1374 = vpack.c.b16 %v1359, %v1358
    %v1375 = vpack.c.b16 %v1361, %v1360
    %v1376 = vpack.c.b16 %v1363, %v1362
    %v1377 = vpack.c.b16 %v1365, %v1364
    %v1378 = vpack.c.b16 %v1367, %v1366
    %v1379 = vpack.c.b16 %v1369, %v1368
    %v1380 = vpack.c.b16 %v1371, %v1370
    %v1381 = vpack.c.b16 %v1373, %v1372
    %1390 = vmatpush.bf16.msra.mxu0 %v1381
    %1391 = vmatpush.bf16.msra.mxu0 %v1380
    %1392 = vmatpush.bf16.msra.mxu0 %v1379
    %1393 = vmatpush.bf16.msra.mxu0 %v1378
    %1394 = vmatpush.bf16.msra.mxu0 %v1377
    %1395 = vmatpush.bf16.msra.mxu0 %v1376
    %1396 = vmatpush.bf16.msra.mxu0 %v1375
    %1397 = vmatpush.bf16.msra.mxu0 %v1374
    %1398 = vmatmul.bf16.gmra.mxu0 %v1338
    %v1399 = vpop.f32.mrf.mxu0
    %v1400 = vadd.f32 0.0, %v1399
    %v1401 = vpop.f32.mrf.mxu0
    %v1402 = vadd.f32 0.0, %v1401
    %1403 = vmatmul.bf16.gmra.mxu0 %v1339
    %v1404 = vpop.f32.mrf.mxu0
    %v1405 = vadd.f32 0.0, %v1404
    %v1406 = vpop.f32.mrf.mxu0
    %v1407 = vadd.f32 0.0, %v1406
    %1408 = vdwg.mxu0
    %v1409 = vadd.f32 %v1321, %v1400
    %v1410 = vadd.f32 %v1322, %v1402
    %v1411 = vadd.f32 %v1323, %v1405
    %v1412 = vadd.f32 %v1324, %v1407
    %v1413 = vld [vmem:[%s6] sm:$0x1]
    %v1415 = vperm.slane %v1413, 0
    %v1417 = vadd.f32 %v1409, %v1415
    %v1418 = vadd.f32 %v1410, %v1415
    %v1419 = vadd.f32 %v1411, %v1415
    %v1420 = vadd.f32 %v1412, %v1415
    %v1421 = vmax.f32 %v1417, 0.0
    %v1422 = vmax.f32 %v1418, 0.0
    %v1423 = vmax.f32 %v1419, 0.0
    %v1424 = vmax.f32 %v1420, 0.0
    %v1425 = vld [vmem:[%s7] sm:$0x1]
    %v1427 = vperm.slane %v1425, 0
    %v1429 = vmul.f32 %v1421, %v1427
    %v1430 = vmul.f32 %v1422, %v1427
    %v1431 = vmul.f32 %v1423, %v1427
    %v1432 = vmul.f32 %v1424, %v1427
    %v1433 = vsel %vm360, %v1429, 0.0
    %1434 = vadd.xlane.f32.xlu0 %v1433
    %v1435 = vpop.xlane.xlu0 %1434
    %v1436 = vsel %vm360, %v1430, 0.0
    %1437 = vadd.xlane.f32.xlu0 %v1436
    %v1438 = vpop.xlane.xlu0 %1437
    %v1439 = vsel %vm360, %v1431, 0.0
    %1440 = vadd.xlane.f32.xlu0 %v1439
    %v1441 = vpop.xlane.xlu0 %1440
    %v1442 = vsel %vm360, %v1432, 0.0
    %1443 = vadd.xlane.f32.xlu0 %v1442
    %v1444 = vpop.xlane.xlu0 %1443
    %v1445 = vstv %s538
    %v1446 = vadd.f32 %v1435, %v1445
    %v1447 = vadd.f32 %v1438, %v1445
    %v1448 = vadd.f32 %v1441, %v1445
    %v1449 = vadd.f32 %v1444, %v1445
    %v1450 = vsub.f32 0.0, %v1446
    %v1451 = vsub.f32 0.0, %v1447
    %v1452 = vsub.f32 0.0, %v1448
    %v1453 = vsub.f32 0.0, %v1449
    %v1454 = vmul.f32 %v1450, 1.442695
    %v1455 = vpow.pop %v1454
    %v1456 = vmul.f32 %v1451, 1.442695
    %v1457 = vpow.pop %v1456
    %v1458 = vmul.f32 %v1452, 1.442695
    %v1459 = vpow.pop %v1458
    %v1460 = vmul.f32 %v1453, 1.442695
    %v1461 = vpow.pop %v1460
    %v1462 = vadd.f32 %v1455, 1.0
    %v1463 = vadd.f32 %v1457, 1.0
    %v1464 = vadd.f32 %v1459, 1.0
    %v1465 = vadd.f32 %v1461, 1.0
    %v1466 = vrcp.pop %v1462
    %v1467 = vrcp.pop %v1463
    %v1468 = vrcp.pop %v1464
    %v1469 = vrcp.pop %v1465
    %v1470 = vmul.f32 %v1421, %v1466
    %v1471 = vmul.f32 %v1422, %v1467
    %v1472 = vmul.f32 %v1423, %v1468
    %v1473 = vmul.f32 %v1424, %v1469
    %v1474 = vadd.f32 %v1421, %v1470
    %v1475 = vadd.f32 %v1422, %v1471
    %v1476 = vadd.f32 %v1423, %v1472
    %v1477 = vadd.f32 %v1424, %v1473
    %s1478 = sld [smem:[#allocation12 + $0x2]]
    %v1479 = vpack.c.bf16 %v1475, %v1474
    %v1480 = vpack.c.bf16 %v1477, %v1476
    %v1481 = vld [vmem:[#allocation9] sm:$0xff]
    %v1482 = vld [vmem:[#allocation9 + $0x8] sm:$0xff]
    %v1483 = vld [vmem:[#allocation9 + $0x10] sm:$0xf]
    %v1484 = vld [vmem:[#allocation9 + $0x14] sm:$0xff]
    %v1485 = vld [vmem:[#allocation9 + $0x1c] sm:$0xff]
    %v1486 = vld [vmem:[#allocation9 + $0x24] sm:$0xf]
    %v1487 = vld [vmem:[#allocation9 + $0x28] sm:$0xff]
    %v1488 = vld [vmem:[#allocation9 + $0x30] sm:$0xff]
    %v1489 = vld [vmem:[#allocation9 + $0x38] sm:$0xf]
    %v1490 = vld [vmem:[#allocation9 + $0x3c] sm:$0xff]
    %v1491 = vld [vmem:[#allocation9 + $0x44] sm:$0xff]
    %v1492 = vld [vmem:[#allocation9 + $0x4c] sm:$0xf]
    %v1505 = vunpack.c.l.b16 %v1481
    %v1506 = vunpack.c.h.b16 %v1481
    %v1507 = vunpack.c.l.b16 %v1482
    %v1508 = vunpack.c.h.b16 %v1482
    %v1509 = vunpack.c.l.b16 %v1483
    %v1510 = vunpack.c.l.b16 %v1484
    %v1511 = vunpack.c.h.b16 %v1484
    %v1512 = vunpack.c.l.b16 %v1485
    %v1513 = vunpack.c.h.b16 %v1485
    %v1514 = vunpack.c.l.b16 %v1486
    %v1515 = vunpack.c.l.b16 %v1487
    %v1516 = vunpack.c.h.b16 %v1487
    %v1517 = vunpack.c.l.b16 %v1488
    %v1518 = vunpack.c.h.b16 %v1488
    %v1519 = vunpack.c.l.b16 %v1489
    %v1520 = vunpack.c.l.b16 %v1490
    %v1521 = vunpack.c.h.b16 %v1490
    %v1522 = vunpack.c.l.b16 %v1491
    %v1523 = vunpack.c.h.b16 %v1491
    %v1524 = vunpack.c.l.b16 %v1492
    %v1525 = vpack.c.b16 %v1510, %v1505
    %v1526 = vpack.c.b16 %v1511, %v1506
    %v1527 = vpack.c.b16 %v1512, %v1507
    %v1528 = vpack.c.b16 %v1513, %v1508
    %v1529 = vpack.c.b16 %v1514, %v1509
    %v1530 = vpack.c.b16 %v1520, %v1515
    %v1531 = vpack.c.b16 %v1521, %v1516
    %v1532 = vpack.c.b16 %v1522, %v1517
    %v1533 = vpack.c.b16 %v1523, %v1518
    %v1534 = vpack.c.b16 %v1524, %v1519
    %v1546 = vsel %vm360, %v1479, 0
    %v1549 = vsel %vm360, %v1480, 0
    %1551 = vmatpush.bf16.msra.mxu0 0
    %1552 = vmatpush.bf16.msra.mxu0 0
    %1553 = vmatpush.bf16.msra.mxu0 0
    %1554 = vmatpush.bf16.msra.mxu0 0
    %1555 = vmatpush.bf16.msra.mxu0 0
    %1556 = vmatpush.bf16.msra.mxu0 0
    %1557 = vmatpush.bf16.msra.mxu0 %v1530
    %1558 = vmatpush.bf16.msra.mxu0 %v1525
    %1559 = vmatmul.bf16.gmra.mxu0 %v1546
    %v1560 = vpop.f32.mrf.mxu0
    %v1561 = vadd.f32 0.0, %v1560
    %v1562 = vpop.f32.mrf.mxu0
    %v1563 = vadd.f32 0.0, %v1562
    %1564 = vmatmul.bf16.gmra.mxu0 %v1549
    %v1565 = vpop.f32.mrf.mxu0
    %v1566 = vadd.f32 0.0, %v1565
    %v1567 = vpop.f32.mrf.mxu0
    %v1568 = vadd.f32 0.0, %v1567
    %1569 = vdwg.mxu0
    %1570 = vmatpush.bf16.msra.mxu0 0
    %1571 = vmatpush.bf16.msra.mxu0 0
    %1572 = vmatpush.bf16.msra.mxu0 0
    %1573 = vmatpush.bf16.msra.mxu0 0
    %1574 = vmatpush.bf16.msra.mxu0 0
    %1575 = vmatpush.bf16.msra.mxu0 0
    %1576 = vmatpush.bf16.msra.mxu0 %v1531
    %1577 = vmatpush.bf16.msra.mxu0 %v1526
    %1578 = vmatmul.bf16.gmra.mxu0 %v1546
    %v1579 = vpop.f32.mrf.mxu0
    %v1580 = vadd.f32 0.0, %v1579
    %v1581 = vpop.f32.mrf.mxu0
    %v1582 = vadd.f32 0.0, %v1581
    %1583 = vmatmul.bf16.gmra.mxu0 %v1549
    %v1584 = vpop.f32.mrf.mxu0
    %v1585 = vadd.f32 0.0, %v1584
    %v1586 = vpop.f32.mrf.mxu0
    %v1587 = vadd.f32 0.0, %v1586
    %1588 = vdwg.mxu0
    %1589 = vmatpush.bf16.msra.mxu0 0
    %1590 = vmatpush.bf16.msra.mxu0 0
    %1591 = vmatpush.bf16.msra.mxu0 0
    %1592 = vmatpush.bf16.msra.mxu0 0
    %1593 = vmatpush.bf16.msra.mxu0 0
    %1594 = vmatpush.bf16.msra.mxu0 0
    %1595 = vmatpush.bf16.msra.mxu0 %v1532
    %1596 = vmatpush.bf16.msra.mxu0 %v1527
    %1597 = vmatmul.bf16.gmra.mxu0 %v1546
    %v1598 = vpop.f32.mrf.mxu0
    %v1599 = vadd.f32 0.0, %v1598
    %v1600 = vpop.f32.mrf.mxu0
    %v1601 = vadd.f32 0.0, %v1600
    %1602 = vmatmul.bf16.gmra.mxu0 %v1549
    %v1603 = vpop.f32.mrf.mxu0
    %v1604 = vadd.f32 0.0, %v1603
    %v1605 = vpop.f32.mrf.mxu0
    %v1606 = vadd.f32 0.0, %v1605
    %1607 = vdwg.mxu0
    %1608 = vmatpush.bf16.msra.mxu0 0
    %1609 = vmatpush.bf16.msra.mxu0 0
    %1610 = vmatpush.bf16.msra.mxu0 0
    %1611 = vmatpush.bf16.msra.mxu0 0
    %1612 = vmatpush.bf16.msra.mxu0 0
    %1613 = vmatpush.bf16.msra.mxu0 0
    %1614 = vmatpush.bf16.msra.mxu0 %v1533
    %1615 = vmatpush.bf16.msra.mxu0 %v1528
    %1616 = vmatmul.bf16.gmra.mxu0 %v1546
    %v1617 = vpop.f32.mrf.mxu0
    %v1618 = vadd.f32 0.0, %v1617
    %v1619 = vpop.f32.mrf.mxu0
    %v1620 = vadd.f32 0.0, %v1619
    %1621 = vmatmul.bf16.gmra.mxu0 %v1549
    %v1622 = vpop.f32.mrf.mxu0
    %v1623 = vadd.f32 0.0, %v1622
    %v1624 = vpop.f32.mrf.mxu0
    %v1625 = vadd.f32 0.0, %v1624
    %1626 = vdwg.mxu0
    %1627 = vmatpush.bf16.msra.mxu0 0
    %1628 = vmatpush.bf16.msra.mxu0 0
    %1629 = vmatpush.bf16.msra.mxu0 0
    %1630 = vmatpush.bf16.msra.mxu0 0
    %1631 = vmatpush.bf16.msra.mxu0 0
    %1632 = vmatpush.bf16.msra.mxu0 0
    %1633 = vmatpush.bf16.msra.mxu0 %v1534
    %1634 = vmatpush.bf16.msra.mxu0 %v1529
    %1635 = vmatmul.bf16.gmra.mxu0 %v1546
    %v1636 = vpop.f32.mrf.mxu0
    %v1637 = vadd.f32 0.0, %v1636
    %v1638 = vpop.f32.mrf.mxu0
    %v1639 = vadd.f32 0.0, %v1638
    %1640 = vmatmul.bf16.gmra.mxu0 %v1549
    %v1641 = vpop.f32.mrf.mxu0
    %v1642 = vadd.f32 0.0, %v1641
    %v1643 = vpop.f32.mrf.mxu0
    %v1644 = vadd.f32 0.0, %v1643
    %1645 = vdwg.mxu0
    %v1646 = vpack.c.bf16 %v1580, %v1561
    %v1647 = vpack.c.bf16 %v1618, %v1599
    %v1648 = vpack.c.bf16 %v1637, %v1637
    %v1649 = vpack.c.bf16 %v1582, %v1563
    %v1650 = vpack.c.bf16 %v1620, %v1601
    %v1651 = vpack.c.bf16 %v1639, %v1639
    %v1652 = vpack.c.bf16 %v1585, %v1566
    %v1653 = vpack.c.bf16 %v1623, %v1604
    %v1654 = vpack.c.bf16 %v1642, %v1642
    %v1655 = vpack.c.bf16 %v1587, %v1568
    %v1656 = vpack.c.bf16 %v1625, %v1606
    %v1657 = vpack.c.bf16 %v1644, %v1644
    %v1658 = vld [vmem:[#allocation8] sm:$0xf]
    %s1659 = scalar_lea.vmem [#allocation8], 4
    %v1660 = vld [vmem:[%s1659] sm:$0xf]
    %v1665 = vunpack.c.l.b16 %v1646
    %v1666 = vunpack.c.l.b16 %v1649
    %v1667 = vunpack.c.l.b16 %v1652
    %v1668 = vunpack.c.l.b16 %v1655
    %v1669 = vpack.c.b16 %v1666, %v1665
    %v1670 = vpack.c.b16 %v1668, %v1667
    %1671 = vrot.lane.b32.xlu0 %v1669, 64
    %v1672 = vpop.permute.xlu0 %1671
    %1673 = vrot.lane.b32.xlu0 %v1670, 64
    %v1674 = vpop.permute.xlu0 %1673
    %v1678 = vsel %vm360, %v1660, 0
    %1680 = vmatpush.bf16.msra.mxu0 0
    %1681 = vmatpush.bf16.msra.mxu0 0
    %1682 = vmatpush.bf16.msra.mxu0 0
    %1683 = vmatpush.bf16.msra.mxu0 0
    %1684 = vmatpush.bf16.msra.mxu0 0
    %1685 = vmatpush.bf16.msra.mxu0 0
    %1686 = vmatpush.bf16.msra.mxu0 %v1674
    %1687 = vmatpush.bf16.msra.mxu0 %v1672
    %1688 = vmatmul.bf16.gmra.mxu0 %v1678
    %v1689 = vpop.f32.mrf.mxu0
    %v1690 = vadd.f32 0.0, %v1689
    %v1691 = vpop.f32.mrf.mxu0
    %1692 = vdwg.mxu0
    %v1696 = vsel %vm360, %v1658, 0
    %1698 = vmatpush.bf16.msra.mxu0 0
    %1699 = vmatpush.bf16.msra.mxu0 0
    %1700 = vmatpush.bf16.msra.mxu0 0
    %1701 = vmatpush.bf16.msra.mxu0 0
    %1702 = vmatpush.bf16.msra.mxu0 0
    %1703 = vmatpush.bf16.msra.mxu0 0
    %1704 = vmatpush.bf16.msra.mxu0 %v1670
    %1705 = vmatpush.bf16.msra.mxu0 %v1669
    %1706 = vmatmul.bf16.gmra.mxu0 %v1696
    %v1707 = vpop.f32.mrf.mxu0
    %v1708 = vadd.f32 %v1690, %v1707
    %v1709 = vpop.f32.mrf.mxu0
    %1710 = vdwg.mxu0
    %s1711 = scalar_lea.vmem [#allocation8], 8
    %v1712 = vld [vmem:[%s1711] sm:$0xf]
    %v1713 = vunpack.c.h.b16 %v1646
    %v1714 = vunpack.c.h.b16 %v1649
    %v1715 = vunpack.c.h.b16 %v1652
    %v1716 = vunpack.c.h.b16 %v1655
    %v1717 = vpack.c.b16 %v1714, %v1713
    %v1718 = vpack.c.b16 %v1716, %v1715
    %v1722 = vsel %vm360, %v1712, 0
    %1724 = vmatpush.bf16.msra.mxu0 0
    %1725 = vmatpush.bf16.msra.mxu0 0
    %1726 = vmatpush.bf16.msra.mxu0 0
    %1727 = vmatpush.bf16.msra.mxu0 0
    %1728 = vmatpush.bf16.msra.mxu0 0
    %1729 = vmatpush.bf16.msra.mxu0 0
    %1730 = vmatpush.bf16.msra.mxu0 %v1718
    %1731 = vmatpush.bf16.msra.mxu0 %v1717
    %1732 = vmatmul.bf16.gmra.mxu0 %v1722
    %v1733 = vpop.f32.mrf.mxu0
    %v1734 = vadd.f32 0.0, %v1733
    %v1735 = vpop.f32.mrf.mxu0
    %1736 = vdwg.mxu0
    %v1737 = vadd.f32 %v1708, %v1734
    %s1738 = scalar_lea.vmem [#allocation8], 12
    %v1739 = vld [vmem:[%s1738] sm:$0xf]
    %1740 = vrot.lane.b32.xlu0 %v1717, 64
    %v1741 = vpop.permute.xlu0 %1740
    %1742 = vrot.lane.b32.xlu0 %v1718, 64
    %v1743 = vpop.permute.xlu0 %1742
    %v1747 = vsel %vm360, %v1739, 0
    %1749 = vmatpush.bf16.msra.mxu0 0
    %1750 = vmatpush.bf16.msra.mxu0 0
    %1751 = vmatpush.bf16.msra.mxu0 0
    %1752 = vmatpush.bf16.msra.mxu0 0
    %1753 = vmatpush.bf16.msra.mxu0 0
    %1754 = vmatpush.bf16.msra.mxu0 0
    %1755 = vmatpush.bf16.msra.mxu0 %v1743
    %1756 = vmatpush.bf16.msra.mxu0 %v1741
    %1757 = vmatmul.bf16.gmra.mxu0 %v1747
    %v1758 = vpop.f32.mrf.mxu0
    %v1759 = vadd.f32 0.0, %v1758
    %v1760 = vpop.f32.mrf.mxu0
    %1761 = vdwg.mxu0
    %v1762 = vadd.f32 %v1737, %v1759
    %s1763 = scalar_lea.vmem [#allocation8], 16
    %v1764 = vld [vmem:[%s1763] sm:$0xf]
    %v1769 = vunpack.c.l.b16 %v1647
    %v1770 = vunpack.c.l.b16 %v1650
    %v1771 = vunpack.c.l.b16 %v1653
    %v1772 = vunpack.c.l.b16 %v1656
    %v1773 = vpack.c.b16 %v1770, %v1769
    %v1774 = vpack.c.b16 %v1772, %v1771
    %v1778 = vsel %vm360, %v1764, 0
    %1780 = vmatpush.bf16.msra.mxu0 0
    %1781 = vmatpush.bf16.msra.mxu0 0
    %1782 = vmatpush.bf16.msra.mxu0 0
    %1783 = vmatpush.bf16.msra.mxu0 0
    %1784 = vmatpush.bf16.msra.mxu0 0
    %1785 = vmatpush.bf16.msra.mxu0 0
    %1786 = vmatpush.bf16.msra.mxu0 %v1774
    %1787 = vmatpush.bf16.msra.mxu0 %v1773
    %1788 = vmatmul.bf16.gmra.mxu0 %v1778
    %v1789 = vpop.f32.mrf.mxu0
    %v1790 = vadd.f32 0.0, %v1789
    %v1791 = vpop.f32.mrf.mxu0
    %1792 = vdwg.mxu0
    %v1793 = vadd.f32 %v1762, %v1790
    %s1794 = scalar_lea.vmem [#allocation8], 20
    %v1795 = vld [vmem:[%s1794] sm:$0xf]
    %1796 = vrot.lane.b32.xlu0 %v1773, 64
    %v1797 = vpop.permute.xlu0 %1796
    %1798 = vrot.lane.b32.xlu0 %v1774, 64
    %v1799 = vpop.permute.xlu0 %1798
    %v1803 = vsel %vm360, %v1795, 0
    %1805 = vmatpush.bf16.msra.mxu0 0
    %1806 = vmatpush.bf16.msra.mxu0 0
    %1807 = vmatpush.bf16.msra.mxu0 0
    %1808 = vmatpush.bf16.msra.mxu0 0
    %1809 = vmatpush.bf16.msra.mxu0 0
    %1810 = vmatpush.bf16.msra.mxu0 0
    %1811 = vmatpush.bf16.msra.mxu0 %v1799
    %1812 = vmatpush.bf16.msra.mxu0 %v1797
    %1813 = vmatmul.bf16.gmra.mxu0 %v1803
    %v1814 = vpop.f32.mrf.mxu0
    %v1815 = vadd.f32 0.0, %v1814
    %v1816 = vpop.f32.mrf.mxu0
    %1817 = vdwg.mxu0
    %v1818 = vadd.f32 %v1793, %v1815
    %s1819 = scalar_lea.vmem [#allocation8], 24
    %v1820 = vld [vmem:[%s1819] sm:$0xf]
    %v1821 = vunpack.c.h.b16 %v1647
    %v1822 = vunpack.c.h.b16 %v1650
    %v1823 = vunpack.c.h.b16 %v1653
    %v1824 = vunpack.c.h.b16 %v1656
    %v1825 = vpack.c.b16 %v1822, %v1821
    %v1826 = vpack.c.b16 %v1824, %v1823
    %v1830 = vsel %vm360, %v1820, 0
    %1832 = vmatpush.bf16.msra.mxu0 0
    %1833 = vmatpush.bf16.msra.mxu0 0
    %1834 = vmatpush.bf16.msra.mxu0 0
    %1835 = vmatpush.bf16.msra.mxu0 0
    %1836 = vmatpush.bf16.msra.mxu0 0
    %1837 = vmatpush.bf16.msra.mxu0 0
    %1838 = vmatpush.bf16.msra.mxu0 %v1826
    %1839 = vmatpush.bf16.msra.mxu0 %v1825
    %1840 = vmatmul.bf16.gmra.mxu0 %v1830
    %v1841 = vpop.f32.mrf.mxu0
    %v1842 = vadd.f32 0.0, %v1841
    %v1843 = vpop.f32.mrf.mxu0
    %1844 = vdwg.mxu0
    %v1845 = vadd.f32 %v1818, %v1842
    %s1846 = scalar_lea.vmem [#allocation8], 28
    %v1847 = vld [vmem:[%s1846] sm:$0xf]
    %1848 = vrot.lane.b32.xlu0 %v1825, 64
    %v1849 = vpop.permute.xlu0 %1848
    %1850 = vrot.lane.b32.xlu0 %v1826, 64
    %v1851 = vpop.permute.xlu0 %1850
    %v1855 = vsel %vm360, %v1847, 0
    %1857 = vmatpush.bf16.msra.mxu0 0
    %1858 = vmatpush.bf16.msra.mxu0 0
    %1859 = vmatpush.bf16.msra.mxu0 0
    %1860 = vmatpush.bf16.msra.mxu0 0
    %1861 = vmatpush.bf16.msra.mxu0 0
    %1862 = vmatpush.bf16.msra.mxu0 0
    %1863 = vmatpush.bf16.msra.mxu0 %v1851
    %1864 = vmatpush.bf16.msra.mxu0 %v1849
    %1865 = vmatmul.bf16.gmra.mxu0 %v1855
    %v1866 = vpop.f32.mrf.mxu0
    %v1867 = vadd.f32 0.0, %v1866
    %v1868 = vpop.f32.mrf.mxu0
    %1869 = vdwg.mxu0
    %v1870 = vadd.f32 %v1845, %v1867
    %s1871 = scalar_lea.vmem [#allocation8], 32
    %v1872 = vld [vmem:[%s1871] sm:$0xf]
    %v1877 = vunpack.c.l.b16 %v1648
    %v1878 = vunpack.c.l.b16 %v1651
    %v1879 = vunpack.c.l.b16 %v1654
    %v1880 = vunpack.c.l.b16 %v1657
    %v1881 = vpack.c.b16 %v1878, %v1877
    %v1882 = vpack.c.b16 %v1880, %v1879
    %v1886 = vsel %vm360, %v1872, 0
    %1888 = vmatpush.bf16.msra.mxu0 0
    %1889 = vmatpush.bf16.msra.mxu0 0
    %1890 = vmatpush.bf16.msra.mxu0 0
    %1891 = vmatpush.bf16.msra.mxu0 0
    %1892 = vmatpush.bf16.msra.mxu0 0
    %1893 = vmatpush.bf16.msra.mxu0 0
    %1894 = vmatpush.bf16.msra.mxu0 %v1882
    %1895 = vmatpush.bf16.msra.mxu0 %v1881
    %1896 = vmatmul.bf16.gmra.mxu0 %v1886
    %v1897 = vpop.f32.mrf.mxu0
    %v1898 = vadd.f32 0.0, %v1897
    %v1899 = vpop.f32.mrf.mxu0
    %1900 = vdwg.mxu0
    %v1901 = vadd.f32 %v1870, %v1898
    %v1902 = vld [vmem:[%s10] sm:$0x1]
    %v1904 = vperm.slane %v1902, 0
    %v1906 = vadd.f32 %v1901, %v1904
    %v1907 = vmax.f32 %v1906, 0.0
    %v1908 = vld [vmem:[%s11] sm:$0x1]
    %v1910 = vperm.slane %v1908, 0
    %v1912 = vmul.f32 %v1907, %v1910
    %vm1913 = vcmask 523264
    %v1914 = vsel %vm1913, %v1912, 0.0
    %1915 = vadd.xlane.f32.xlu0 %v1914
    %v1916 = vpop.xlane.xlu0 %1915
    %v1917 = vstv %s1478
    %v1918 = vadd.f32 %v1916, %v1917
    %v1919 = vsub.f32 0.0, %v1918
    %v1920 = vmul.f32 %v1919, 1.442695
    %v1921 = vpow.pop %v1920
    %v1922 = vadd.f32 %v1921, 1.0
    %v1923 = vrcp.pop %v1922
    %v1924 = vmul.f32 %v1907, %v1923
    %v1925 = vadd.f32 %v1907, %v1924
    %s1926 = sld [smem:[#allocation12 + $0x3]]
    %v1927 = vpack.c.bf16 %v1925, %v1925
    %v1928 = vld [vmem:[%s13] sm:$0xff]
    %v1929 = vld [vmem:[%s13 + $0x8] sm:$0xff]
    %v1930 = vld [vmem:[%s13 + $0x10] sm:$0xf]
    %v1931 = vld [vmem:[%s13 + $0x14] sm:$0xff]
    %v1932 = vld [vmem:[%s13 + $0x1c] sm:$0xff]
    %v1933 = vld [vmem:[%s13 + $0x24] sm:$0xf]
    %v1934 = vld [vmem:[%s13 + $0x28] sm:$0xff]
    %v1935 = vld [vmem:[%s13 + $0x30] sm:$0xff]
    %v1936 = vld [vmem:[%s13 + $0x38] sm:$0xf]
    %v1937 = vld [vmem:[%s13 + $0x3c] sm:$0xff]
    %v1938 = vld [vmem:[%s13 + $0x44] sm:$0xff]
    %v1939 = vld [vmem:[%s13 + $0x4c] sm:$0xf]
    %v1940 = vld [vmem:[%s13 + $0x50] sm:$0xff]
    %v1941 = vld [vmem:[%s13 + $0x58] sm:$0xff]
    %v1942 = vld [vmem:[%s13 + $0x60] sm:$0xf]
    %v1943 = vld [vmem:[%s13 + $0x64] sm:$0xff]
    %v1944 = vld [vmem:[%s13 + $0x6c] sm:$0xff]
    %v1945 = vld [vmem:[%s13 + $0x74] sm:$0xf]
    %v1946 = vld [vmem:[%s13 + $0x78] sm:$0xff]
    %v1947 = vld [vmem:[%s13 + $0x80] sm:$0xff]
    %v1948 = vld [vmem:[%s13 + $0x88] sm:$0xf]
    %v1949 = vld [vmem:[%s13 + $0x8c] sm:$0xff]
    %v1950 = vld [vmem:[%s13 + $0x94] sm:$0xff]
    %v1951 = vld [vmem:[%s13 + $0x9c] sm:$0xf]
    %v1976 = vunpack.c.l.b16 %v1928
    %v1977 = vunpack.c.h.b16 %v1928
    %v1978 = vunpack.c.l.b16 %v1929
    %v1979 = vunpack.c.h.b16 %v1929
    %v1980 = vunpack.c.l.b16 %v1930
    %v1981 = vunpack.c.l.b16 %v1931
    %v1982 = vunpack.c.h.b16 %v1931
    %v1983 = vunpack.c.l.b16 %v1932
    %v1984 = vunpack.c.h.b16 %v1932
    %v1985 = vunpack.c.l.b16 %v1933
    %v1986 = vunpack.c.l.b16 %v1934
    %v1987 = vunpack.c.h.b16 %v1934
    %v1988 = vunpack.c.l.b16 %v1935
    %v1989 = vunpack.c.h.b16 %v1935
    %v1990 = vunpack.c.l.b16 %v1936
    %v1991 = vunpack.c.l.b16 %v1937
    %v1992 = vunpack.c.h.b16 %v1937
    %v1993 = vunpack.c.l.b16 %v1938
    %v1994 = vunpack.c.h.b16 %v1938
    %v1995 = vunpack.c.l.b16 %v1939
    %v1996 = vunpack.c.l.b16 %v1940
    %v1997 = vunpack.c.h.b16 %v1940
    %v1998 = vunpack.c.l.b16 %v1941
    %v1999 = vunpack.c.h.b16 %v1941
    %v2000 = vunpack.c.l.b16 %v1942
    %v2001 = vunpack.c.l.b16 %v1943
    %v2002 = vunpack.c.h.b16 %v1943
    %v2003 = vunpack.c.l.b16 %v1944
    %v2004 = vunpack.c.h.b16 %v1944
    %v2005 = vunpack.c.l.b16 %v1945
    %v2006 = vunpack.c.l.b16 %v1946
    %v2007 = vunpack.c.h.b16 %v1946
    %v2008 = vunpack.c.l.b16 %v1947
    %v2009 = vunpack.c.h.b16 %v1947
    %v2010 = vunpack.c.l.b16 %v1948
    %v2011 = vunpack.c.l.b16 %v1949
    %v2012 = vunpack.c.h.b16 %v1949
    %v2013 = vunpack.c.l.b16 %v1950
    %v2014 = vunpack.c.h.b16 %v1950
    %v2015 = vunpack.c.l.b16 %v1951
    %v2016 = vpack.c.b16 %v1981, %v1976
    %v2017 = vpack.c.b16 %v1982, %v1977
    %v2018 = vpack.c.b16 %v1983, %v1978
    %v2019 = vpack.c.b16 %v1984, %v1979
    %v2020 = vpack.c.b16 %v1985, %v1980
    %v2021 = vpack.c.b16 %v1991, %v1986
    %v2022 = vpack.c.b16 %v1992, %v1987
    %v2023 = vpack.c.b16 %v1993, %v1988
    %v2024 = vpack.c.b16 %v1994, %v1989
    %v2025 = vpack.c.b16 %v1995, %v1990
    %v2026 = vpack.c.b16 %v2001, %v1996
    %v2027 = vpack.c.b16 %v2002, %v1997
    %v2028 = vpack.c.b16 %v2003, %v1998
    %v2029 = vpack.c.b16 %v2004, %v1999
    %v2030 = vpack.c.b16 %v2005, %v2000
    %v2031 = vpack.c.b16 %v2011, %v2006
    %v2032 = vpack.c.b16 %v2012, %v2007
    %v2033 = vpack.c.b16 %v2013, %v2008
    %v2034 = vpack.c.b16 %v2014, %v2009
    %v2035 = vpack.c.b16 %v2015, %v2010
    %v2057 = vsel %vm1913, %v1927, 0
    %2059 = vmatpush.bf16.msra.mxu0 0
    %2060 = vmatpush.bf16.msra.mxu0 0
    %2061 = vmatpush.bf16.msra.mxu0 0
    %2062 = vmatpush.bf16.msra.mxu0 0
    %2063 = vmatpush.bf16.msra.mxu0 %v2031
    %2064 = vmatpush.bf16.msra.mxu0 %v2026
    %2065 = vmatpush.bf16.msra.mxu0 %v2021
    %2066 = vmatpush.bf16.msra.mxu0 %v2016
    %2067 = vmatmul.bf16.gmra.mxu0 %v2057
    %v2068 = vpop.f32.mrf.mxu0
    %v2069 = vadd.f32 0.0, %v2068
    %v2070 = vpop.f32.mrf.mxu0
    %2071 = vdwg.mxu0
    %2072 = vmatpush.bf16.msra.mxu0 0
    %2073 = vmatpush.bf16.msra.mxu0 0
    %2074 = vmatpush.bf16.msra.mxu0 0
    %2075 = vmatpush.bf16.msra.mxu0 0
    %2076 = vmatpush.bf16.msra.mxu0 %v2032
    %2077 = vmatpush.bf16.msra.mxu0 %v2027
    %2078 = vmatpush.bf16.msra.mxu0 %v2022
    %2079 = vmatpush.bf16.msra.mxu0 %v2017
    %2080 = vmatmul.bf16.gmra.mxu0 %v2057
    %v2081 = vpop.f32.mrf.mxu0
    %v2082 = vadd.f32 0.0, %v2081
    %v2083 = vpop.f32.mrf.mxu0
    %2084 = vdwg.mxu0
    %2085 = vmatpush.bf16.msra.mxu0 0
    %2086 = vmatpush.bf16.msra.mxu0 0
    %2087 = vmatpush.bf16.msra.mxu0 0
    %2088 = vmatpush.bf16.msra.mxu0 0
    %2089 = vmatpush.bf16.msra.mxu0 %v2033
    %2090 = vmatpush.bf16.msra.mxu0 %v2028
    %2091 = vmatpush.bf16.msra.mxu0 %v2023
    %2092 = vmatpush.bf16.msra.mxu0 %v2018
    %2093 = vmatmul.bf16.gmra.mxu0 %v2057
    %v2094 = vpop.f32.mrf.mxu0
    %v2095 = vadd.f32 0.0, %v2094
    %v2096 = vpop.f32.mrf.mxu0
    %2097 = vdwg.mxu0
    %2098 = vmatpush.bf16.msra.mxu0 0
    %2099 = vmatpush.bf16.msra.mxu0 0
    %2100 = vmatpush.bf16.msra.mxu0 0
    %2101 = vmatpush.bf16.msra.mxu0 0
    %2102 = vmatpush.bf16.msra.mxu0 %v2034
    %2103 = vmatpush.bf16.msra.mxu0 %v2029
    %2104 = vmatpush.bf16.msra.mxu0 %v2024
    %2105 = vmatpush.bf16.msra.mxu0 %v2019
    %2106 = vmatmul.bf16.gmra.mxu0 %v2057
    %v2107 = vpop.f32.mrf.mxu0
    %v2108 = vadd.f32 0.0, %v2107
    %v2109 = vpop.f32.mrf.mxu0
    %2110 = vdwg.mxu0
    %2111 = vmatpush.bf16.msra.mxu0 0
    %2112 = vmatpush.bf16.msra.mxu0 0
    %2113 = vmatpush.bf16.msra.mxu0 0
    %2114 = vmatpush.bf16.msra.mxu0 0
    %2115 = vmatpush.bf16.msra.mxu0 %v2035
    %2116 = vmatpush.bf16.msra.mxu0 %v2030
    %2117 = vmatpush.bf16.msra.mxu0 %v2025
    %2118 = vmatpush.bf16.msra.mxu0 %v2020
    %2119 = vmatmul.bf16.gmra.mxu0 %v2057
    %v2120 = vpop.f32.mrf.mxu0
    %v2121 = vadd.f32 0.0, %v2120
    %v2122 = vpop.f32.mrf.mxu0
    %2123 = vdwg.mxu0
    %v2124 = vpack.c.bf16 %v2082, %v2069
    %v2125 = vpack.c.bf16 %v2108, %v2095
    %v2126 = vpack.c.bf16 %v2121, %v2121
    %v2127 = vld [vmem:[%s12] sm:$0x1]
    %s2128 = scalar_lea.vmem %s12, 1
    %v2129 = vld [vmem:[%s2128] sm:$0x1]
    %v2131 = vunpack.c.l.b16 %v2124
    %v2132 = vpack.c.b16 %v2131, %v2131
    %2133 = vrot.lane.b32.xlu0 %v2132, 64
    %v2134 = vpop.permute.xlu0 %2133
    %vm2135 = vcmask 64512
    %v2137 = vsel %vm2135, %v2129, 0
    %vm2139 = vcmask 1043456
    %v2141 = vsel %vm2139, %v2134, 0
    %2143 = vmatpush.bf16.msra.mxu0 0
    %2144 = vmatpush.bf16.msra.mxu0 0
    %2145 = vmatpush.bf16.msra.mxu0 0
    %2146 = vmatpush.bf16.msra.mxu0 0
    %2147 = vmatpush.bf16.msra.mxu0 0
    %2148 = vmatpush.bf16.msra.mxu0 0
    %2149 = vmatpush.bf16.msra.mxu0 0
    %2150 = vmatpush.bf16.msra.mxu0 %v2141
    %2151 = vmatmul.bf16.gmra.mxu0 %v2137
    %v2152 = vpop.f32.mrf.mxu0
    %v2153 = vadd.f32 0.0, %v2152
    %v2154 = vpop.f32.mrf.mxu0
    %2155 = vdwg.mxu0
    %v2157 = vsel %vm2135, %v2127, 0
    %v2160 = vsel %vm2139, %v2124, 0
    %2162 = vmatpush.bf16.msra.mxu0 0
    %2163 = vmatpush.bf16.msra.mxu0 0
    %2164 = vmatpush.bf16.msra.mxu0 0
    %2165 = vmatpush.bf16.msra.mxu0 0
    %2166 = vmatpush.bf16.msra.mxu0 0
    %2167 = vmatpush.bf16.msra.mxu0 0
    %2168 = vmatpush.bf16.msra.mxu0 0
    %2169 = vmatpush.bf16.msra.mxu0 %v2160
    %2170 = vmatmul.bf16.gmra.mxu0 %v2157
    %v2171 = vpop.f32.mrf.mxu0
    %v2172 = vadd.f32 %v2153, %v2171
    %v2173 = vpop.f32.mrf.mxu0
    %2174 = vdwg.mxu0
    %s2175 = scalar_lea.vmem %s12, 2
    %v2176 = vld [vmem:[%s2175] sm:$0x1]
    %v2177 = vunpack.c.h.b16 %v2124
    %v2178 = vpack.c.b16 %v2177, %v2177
    %v2180 = vsel %vm2135, %v2176, 0
    %v2183 = vsel %vm2139, %v2178, 0
    %2185 = vmatpush.bf16.msra.mxu0 0
    %2186 = vmatpush.bf16.msra.mxu0 0
    %2187 = vmatpush.bf16.msra.mxu0 0
    %2188 = vmatpush.bf16.msra.mxu0 0
    %2189 = vmatpush.bf16.msra.mxu0 0
    %2190 = vmatpush.bf16.msra.mxu0 0
    %2191 = vmatpush.bf16.msra.mxu0 0
    %2192 = vmatpush.bf16.msra.mxu0 %v2183
    %2193 = vmatmul.bf16.gmra.mxu0 %v2180
    %v2194 = vpop.f32.mrf.mxu0
    %v2195 = vadd.f32 0.0, %v2194
    %v2196 = vpop.f32.mrf.mxu0
    %2197 = vdwg.mxu0
    %v2198 = vadd.f32 %v2172, %v2195
    %s2199 = scalar_lea.vmem %s12, 3
    %v2200 = vld [vmem:[%s2199] sm:$0x1]
    %2201 = vrot.lane.b32.xlu0 %v2178, 64
    %v2202 = vpop.permute.xlu0 %2201
    %v2204 = vsel %vm2135, %v2200, 0
    %v2207 = vsel %vm2139, %v2202, 0
    %2209 = vmatpush.bf16.msra.mxu0 0
    %2210 = vmatpush.bf16.msra.mxu0 0
    %2211 = vmatpush.bf16.msra.mxu0 0
    %2212 = vmatpush.bf16.msra.mxu0 0
    %2213 = vmatpush.bf16.msra.mxu0 0
    %2214 = vmatpush.bf16.msra.mxu0 0
    %2215 = vmatpush.bf16.msra.mxu0 0
    %2216 = vmatpush.bf16.msra.mxu0 %v2207
    %2217 = vmatmul.bf16.gmra.mxu0 %v2204
    %v2218 = vpop.f32.mrf.mxu0
    %v2219 = vadd.f32 0.0, %v2218
    %v2220 = vpop.f32.mrf.mxu0
    %2221 = vdwg.mxu0
    %v2222 = vadd.f32 %v2198, %v2219
    %s2223 = scalar_lea.vmem %s12, 4
    %v2224 = vld [vmem:[%s2223] sm:$0x1]
    %v2226 = vsel %vm2135, %v2224, 0
    %v2229 = vsel %vm2139, %v2125, 0
    %2231 = vmatpush.bf16.msra.mxu0 0
    %2232 = vmatpush.bf16.msra.mxu0 0
    %2233 = vmatpush.bf16.msra.mxu0 0
    %2234 = vmatpush.bf16.msra.mxu0 0
    %2235 = vmatpush.bf16.msra.mxu0 0
    %2236 = vmatpush.bf16.msra.mxu0 0
    %2237 = vmatpush.bf16.msra.mxu0 0
    %2238 = vmatpush.bf16.msra.mxu0 %v2229
    %2239 = vmatmul.bf16.gmra.mxu0 %v2226
    %v2240 = vpop.f32.mrf.mxu0
    %v2241 = vadd.f32 0.0, %v2240
    %v2242 = vpop.f32.mrf.mxu0
    %2243 = vdwg.mxu0
    %v2244 = vadd.f32 %v2222, %v2241
    %s2245 = scalar_lea.vmem %s12, 5
    %v2246 = vld [vmem:[%s2245] sm:$0x1]
    %v2248 = vunpack.c.l.b16 %v2125
    %v2249 = vpack.c.b16 %v2248, %v2248
    %2250 = vrot.lane.b32.xlu0 %v2249, 64
    %v2251 = vpop.permute.xlu0 %2250
    %v2253 = vsel %vm2135, %v2246, 0
    %v2256 = vsel %vm2139, %v2251, 0
    %2258 = vmatpush.bf16.msra.mxu0 0
    %2259 = vmatpush.bf16.msra.mxu0 0
    %2260 = vmatpush.bf16.msra.mxu0 0
    %2261 = vmatpush.bf16.msra.mxu0 0
    %2262 = vmatpush.bf16.msra.mxu0 0
    %2263 = vmatpush.bf16.msra.mxu0 0
    %2264 = vmatpush.bf16.msra.mxu0 0
    %2265 = vmatpush.bf16.msra.mxu0 %v2256
    %2266 = vmatmul.bf16.gmra.mxu0 %v2253
    %v2267 = vpop.f32.mrf.mxu0
    %v2268 = vadd.f32 0.0, %v2267
    %v2269 = vpop.f32.mrf.mxu0
    %2270 = vdwg.mxu0
    %v2271 = vadd.f32 %v2244, %v2268
    %s2272 = scalar_lea.vmem %s12, 6
    %v2273 = vld [vmem:[%s2272] sm:$0x1]
    %v2274 = vunpack.c.h.b16 %v2125
    %v2275 = vpack.c.b16 %v2274, %v2274
    %v2277 = vsel %vm2135, %v2273, 0
    %v2280 = vsel %vm2139, %v2275, 0
    %2282 = vmatpush.bf16.msra.mxu0 0
    %2283 = vmatpush.bf16.msra.mxu0 0
    %2284 = vmatpush.bf16.msra.mxu0 0
    %2285 = vmatpush.bf16.msra.mxu0 0
    %2286 = vmatpush.bf16.msra.mxu0 0
    %2287 = vmatpush.bf16.msra.mxu0 0
    %2288 = vmatpush.bf16.msra.mxu0 0
    %2289 = vmatpush.bf16.msra.mxu0 %v2280
    %2290 = vmatmul.bf16.gmra.mxu0 %v2277
    %v2291 = vpop.f32.mrf.mxu0
    %v2292 = vadd.f32 0.0, %v2291
    %v2293 = vpop.f32.mrf.mxu0
    %2294 = vdwg.mxu0
    %v2295 = vadd.f32 %v2271, %v2292
    %s2296 = scalar_lea.vmem %s12, 7
    %v2297 = vld [vmem:[%s2296] sm:$0x1]
    %2298 = vrot.lane.b32.xlu0 %v2275, 64
    %v2299 = vpop.permute.xlu0 %2298
    %v2301 = vsel %vm2135, %v2297, 0
    %v2304 = vsel %vm2139, %v2299, 0
    %2306 = vmatpush.bf16.msra.mxu0 0
    %2307 = vmatpush.bf16.msra.mxu0 0
    %2308 = vmatpush.bf16.msra.mxu0 0
    %2309 = vmatpush.bf16.msra.mxu0 0
    %2310 = vmatpush.bf16.msra.mxu0 0
    %2311 = vmatpush.bf16.msra.mxu0 0
    %2312 = vmatpush.bf16.msra.mxu0 0
    %2313 = vmatpush.bf16.msra.mxu0 %v2304
    %2314 = vmatmul.bf16.gmra.mxu0 %v2301
    %v2315 = vpop.f32.mrf.mxu0
    %v2316 = vadd.f32 0.0, %v2315
    %v2317 = vpop.f32.mrf.mxu0
    %2318 = vdwg.mxu0
    %v2319 = vadd.f32 %v2295, %v2316
    %s2320 = scalar_lea.vmem %s12, 8
    %v2321 = vld [vmem:[%s2320] sm:$0x1]
    %v2323 = vsel %vm2135, %v2321, 0
    %v2326 = vsel %vm2139, %v2126, 0
    %2328 = vmatpush.bf16.msra.mxu0 0
    %2329 = vmatpush.bf16.msra.mxu0 0
    %2330 = vmatpush.bf16.msra.mxu0 0
    %2331 = vmatpush.bf16.msra.mxu0 0
    %2332 = vmatpush.bf16.msra.mxu0 0
    %2333 = vmatpush.bf16.msra.mxu0 0
    %2334 = vmatpush.bf16.msra.mxu0 0
    %2335 = vmatpush.bf16.msra.mxu0 %v2326
    %2336 = vmatmul.bf16.gmra.mxu0 %v2323
    %v2337 = vpop.f32.mrf.mxu0
    %v2338 = vadd.f32 0.0, %v2337
    %v2339 = vpop.f32.mrf.mxu0
    %2340 = vdwg.mxu0
    %v2341 = vadd.f32 %v2319, %v2338
    %v2342 = vld [vmem:[#allocation11] sm:$0x1]
    %v2344 = vperm.slane %v2342, 0
    %v2346 = vadd.f32 %v2341, %v2344
    %v2347 = vmax.f32 %v2346, 0.0
    %v2348 = vld [vmem:[%s15] sm:$0x1]
    %v2350 = vperm.slane %v2348, 0
    %v2352 = vmul.f32 %v2347, %v2350
    %vm2353 = vcmask 517120
    %v2354 = vsel %vm2353, %v2352, 0.0
    %2355 = vadd.xlane.f32.xlu0 %v2354
    %v2356 = vpop.xlane.xlu0 %2355
    %v2357 = vstv %s1926
    %v2358 = vadd.f32 %v2356, %v2357
    %v2359 = vsub.f32 0.0, %v2358
    %v2360 = vmul.f32 %v2359, 1.442695
    %v2361 = vpow.pop %v2360
    %v2362 = vadd.f32 %v2361, 1.0
    %v2363 = vrcp.pop %v2362
    %v2364 = vmul.f32 %v2347, %v2363
    %v2365 = vadd.f32 %v2347, %v2364
    %v2366 = vld [vmem:[%s17] sm:$0x1]
    %v2367 = vld [vmem:[%s18] sm:$0x1]
    %v2368 = vmul.f32 %v2366, %v2367
    %v2370 = vperm.slane %v2368, 0
    %v2372 = vadd.f32 %v2365, %v2370
    %v2373 = vpack.c.bf16 %v2372, %v2372
    %v2374 = vld [vmem:[%s19] sm:$0xff]
    %v2375 = vld [vmem:[%s19 + $0x8] sm:$0xff]
    %v2376 = vld [vmem:[%s19 + $0x10] sm:$0xff]
    %v2377 = vld [vmem:[%s19 + $0x18] sm:$0xff]
    %v2378 = vld [vmem:[%s19 + $0x20] sm:$0xff]
    %v2379 = vld [vmem:[%s19 + $0x28] sm:$0xff]
    %v2380 = vld [vmem:[%s19 + $0x30] sm:$0xff]
    %v2381 = vld [vmem:[%s19 + $0x38] sm:$0xff]
    %v2382 = vld [vmem:[%s20] sm:$0x3]
    %v2384 = vperm.slane %v2382, 0
    %v2385 = vperm.slane %v2382, 1
    %v2396 = vunpack.c.l.b16 %v2374
    %v2397 = vunpack.c.h.b16 %v2374
    %v2398 = vunpack.c.l.b16 %v2375
    %v2399 = vunpack.c.h.b16 %v2375
    %v2400 = vunpack.c.l.b16 %v2376
    %v2401 = vunpack.c.h.b16 %v2376
    %v2402 = vunpack.c.l.b16 %v2377
    %v2403 = vunpack.c.h.b16 %v2377
    %v2404 = vunpack.c.l.b16 %v2378
    %v2405 = vunpack.c.h.b16 %v2378
    %v2406 = vunpack.c.l.b16 %v2379
    %v2407 = vunpack.c.h.b16 %v2379
    %v2408 = vunpack.c.l.b16 %v2380
    %v2409 = vunpack.c.h.b16 %v2380
    %v2410 = vunpack.c.l.b16 %v2381
    %v2411 = vunpack.c.h.b16 %v2381
    %v2412 = vpack.c.b16 %v2398, %v2396
    %v2413 = vpack.c.b16 %v2399, %v2397
    %v2414 = vpack.c.b16 %v2402, %v2400
    %v2415 = vpack.c.b16 %v2403, %v2401
    %v2416 = vpack.c.b16 %v2406, %v2404
    %v2417 = vpack.c.b16 %v2407, %v2405
    %v2418 = vpack.c.b16 %v2410, %v2408
    %v2419 = vpack.c.b16 %v2411, %v2409
    %v2429 = vsel %vm1913, %v2373, 0
    %2431 = vmatpush.bf16.msra.mxu0 0
    %2432 = vmatpush.bf16.msra.mxu0 0
    %2433 = vmatpush.bf16.msra.mxu0 0
    %2434 = vmatpush.bf16.msra.mxu0 0
    %2435 = vmatpush.bf16.msra.mxu0 %v2418
    %2436 = vmatpush.bf16.msra.mxu0 %v2416
    %2437 = vmatpush.bf16.msra.mxu0 %v2414
    %2438 = vmatpush.bf16.msra.mxu0 %v2412
    %2439 = vmatmul.bf16.gmra.mxu0 %v2429
    %v2440 = vpop.f32.mrf.mxu0
    %v2441 = vadd.f32 %v2384, %v2440
    %v2442 = vpop.f32.mrf.mxu0
    %2443 = vdwg.mxu0
    %2444 = vmatpush.bf16.msra.mxu0 0
    %2445 = vmatpush.bf16.msra.mxu0 0
    %2446 = vmatpush.bf16.msra.mxu0 0
    %2447 = vmatpush.bf16.msra.mxu0 0
    %2448 = vmatpush.bf16.msra.mxu0 %v2419
    %2449 = vmatpush.bf16.msra.mxu0 %v2417
    %2450 = vmatpush.bf16.msra.mxu0 %v2415
    %2451 = vmatpush.bf16.msra.mxu0 %v2413
    %2452 = vmatmul.bf16.gmra.mxu0 %v2429
    %v2453 = vpop.f32.mrf.mxu0
    %v2454 = vadd.f32 %v2385, %v2453
    %v2455 = vpop.f32.mrf.mxu0
    %2456 = vdwg.mxu0
    %v2457 = vmax.f32 %v2441, 0.0
    %v2458 = vmax.f32 %v2454, 0.0
    %v2459 = vpack.c.bf16 %v2457, %v2457
    %v2460 = vpack.c.bf16 %v2458, %v2458
    %v2461 = vld [vmem:[%s21] sm:$0xf]
    %v2462 = vld [vmem:[%s21 + $0x4] sm:$0xf]
    %v2463 = vld [vmem:[%s21 + $0x8] sm:$0xf]
    %v2464 = vld [vmem:[%s21 + $0xc] sm:$0xf]
    %v2465 = vld [vmem:[%s21 + $0x10] sm:$0xf]
    %v2466 = vld [vmem:[%s21 + $0x14] sm:$0xf]
    %v2467 = vld [vmem:[%s21 + $0x18] sm:$0xf]
    %v2468 = vld [vmem:[%s21 + $0x1c] sm:$0xf]
    %v2469 = vld [vmem:[%s21 + $0x20] sm:$0xf]
    %v2470 = vld [vmem:[%s21 + $0x24] sm:$0xf]
    %v2471 = vld [vmem:[%s21 + $0x28] sm:$0xf]
    %v2472 = vld [vmem:[%s21 + $0x2c] sm:$0xf]
    %v2473 = vld [vmem:[%s21 + $0x30] sm:$0xf]
    %v2474 = vld [vmem:[%s21 + $0x34] sm:$0xf]
    %v2475 = vld [vmem:[%s21 + $0x38] sm:$0xf]
    %v2476 = vld [vmem:[%s21 + $0x3c] sm:$0xf]
    %v2477 = vld [vmem:[%s21 + $0x40] sm:$0xf]
    %v2478 = vld [vmem:[%s21 + $0x44] sm:$0xf]
    %v2479 = vld [vmem:[%s21 + $0x48] sm:$0xf]
    %v2480 = vld [vmem:[%s21 + $0x4c] sm:$0xf]
    %v2481 = vld [vmem:[%s21 + $0x50] sm:$0xf]
    %v2482 = vld [vmem:[%s21 + $0x54] sm:$0xf]
    %v2483 = vld [vmem:[%s21 + $0x58] sm:$0xf]
    %v2484 = vld [vmem:[%s21 + $0x5c] sm:$0xf]
    %v2485 = vld [vmem:[%s21 + $0x60] sm:$0xf]
    %v2486 = vld [vmem:[%s21 + $0x64] sm:$0xf]
    %v2487 = vld [vmem:[%s21 + $0x68] sm:$0xf]
    %v2488 = vld [vmem:[%s21 + $0x6c] sm:$0xf]
    %v2489 = vld [vmem:[%s21 + $0x70] sm:$0xf]
    %v2490 = vld [vmem:[%s21 + $0x74] sm:$0xf]
    %v2491 = vld [vmem:[%s21 + $0x78] sm:$0xf]
    %v2492 = vld [vmem:[%s21 + $0x7c] sm:$0xf]
    %v2493 = vld [vmem:[%s22] sm:$0x1]
    %v2495 = vperm.slane %v2493, 0
    %v2529 = vunpack.c.l.b16 %v2461
    %v2530 = vunpack.c.l.b16 %v2462
    %v2531 = vunpack.c.l.b16 %v2463
    %v2532 = vunpack.c.l.b16 %v2464
    %v2533 = vunpack.c.l.b16 %v2465
    %v2534 = vunpack.c.l.b16 %v2466
    %v2535 = vunpack.c.l.b16 %v2467
    %v2536 = vunpack.c.l.b16 %v2468
    %v2537 = vunpack.c.l.b16 %v2469
    %v2538 = vunpack.c.l.b16 %v2470
    %v2539 = vunpack.c.l.b16 %v2471
    %v2540 = vunpack.c.l.b16 %v2472
    %v2541 = vunpack.c.l.b16 %v2473
    %v2542 = vunpack.c.l.b16 %v2474
    %v2543 = vunpack.c.l.b16 %v2475
    %v2544 = vunpack.c.l.b16 %v2476
    %v2545 = vunpack.c.l.b16 %v2477
    %v2546 = vunpack.c.l.b16 %v2478
    %v2547 = vunpack.c.l.b16 %v2479
    %v2548 = vunpack.c.l.b16 %v2480
    %v2549 = vunpack.c.l.b16 %v2481
    %v2550 = vunpack.c.l.b16 %v2482
    %v2551 = vunpack.c.l.b16 %v2483
    %v2552 = vunpack.c.l.b16 %v2484
    %v2553 = vunpack.c.l.b16 %v2485
    %v2554 = vunpack.c.l.b16 %v2486
    %v2555 = vunpack.c.l.b16 %v2487
    %v2556 = vunpack.c.l.b16 %v2488
    %v2557 = vunpack.c.l.b16 %v2489
    %v2558 = vunpack.c.l.b16 %v2490
    %v2559 = vunpack.c.l.b16 %v2491
    %v2560 = vunpack.c.l.b16 %v2492
    %v2561 = vpack.c.b16 %v2530, %v2529
    %v2562 = vpack.c.b16 %v2532, %v2531
    %v2563 = vpack.c.b16 %v2534, %v2533
    %v2564 = vpack.c.b16 %v2536, %v2535
    %v2565 = vpack.c.b16 %v2538, %v2537
    %v2566 = vpack.c.b16 %v2540, %v2539
    %v2567 = vpack.c.b16 %v2542, %v2541
    %v2568 = vpack.c.b16 %v2544, %v2543
    %v2569 = vpack.c.b16 %v2546, %v2545
    %v2570 = vpack.c.b16 %v2548, %v2547
    %v2571 = vpack.c.b16 %v2550, %v2549
    %v2572 = vpack.c.b16 %v2552, %v2551
    %v2573 = vpack.c.b16 %v2554, %v2553
    %v2574 = vpack.c.b16 %v2556, %v2555
    %v2575 = vpack.c.b16 %v2558, %v2557
    %v2576 = vpack.c.b16 %v2560, %v2559
    %2593 = vmatpush.bf16.msra.mxu0 %v2568
    %2594 = vmatpush.bf16.msra.mxu0 %v2567
    %2595 = vmatpush.bf16.msra.mxu0 %v2566
    %2596 = vmatpush.bf16.msra.mxu0 %v2565
    %2597 = vmatpush.bf16.msra.mxu0 %v2564
    %2598 = vmatpush.bf16.msra.mxu0 %v2563
    %2599 = vmatpush.bf16.msra.mxu0 %v2562
    %2600 = vmatpush.bf16.msra.mxu0 %v2561
    %2601 = vmatmul.bf16.gmra.mxu0 %v2459
    %v2602 = vpop.f32.mrf.mxu0
    %v2603 = vadd.f32 %v2495, %v2602
    %v2604 = vpop.f32.mrf.mxu0
    %2605 = vdwg.mxu0
    %2606 = vmatpush.bf16.msra.mxu0 %v2576
    %2607 = vmatpush.bf16.msra.mxu0 %v2575
    %2608 = vmatpush.bf16.msra.mxu0 %v2574
    %2609 = vmatpush.bf16.msra.mxu0 %v2573
    %2610 = vmatpush.bf16.msra.mxu0 %v2572
    %2611 = vmatpush.bf16.msra.mxu0 %v2571
    %2612 = vmatpush.bf16.msra.mxu0 %v2570
    %2613 = vmatpush.bf16.msra.mxu0 %v2569
    %2614 = vmatmul.bf16.gmra.mxu0 %v2460
    %v2615 = vpop.f32.mrf.mxu0
    %v2616 = vadd.f32 %v2603, %v2615
    %v2617 = vpop.f32.mrf.mxu0
    %2618 = vdwg.mxu0
    %2620 = vset.pattern.permute.xlu0 0
    %2621 = vperm.xlu0 %2620, %v2616
    %v2622 = vpop.permute.xlu0 %2621
    %v2624 = vadd.f32 %v2622, %v2616
    %2625 = vrot.lane.b32.xlu0 %v2616, 127
    %v2626 = vpop.permute.xlu0 %2625
    %vm2628 = vcmask 41984
    %v2629 = vsel %vm2628, %v2626, 0.0
    %2630 = vadd.xlane.f32.xlu0 %v2629
    %v2631 = vpop.xlane.xlu0 %2630
    %v2632 = vrot.slane %v2631, 4
    %v2633 = vadd.f32 %v2631, %v2632
    %v2634 = vrot.slane %v2633, 2
    %v2635 = vadd.f32 %v2633, %v2634
    %v2636 = vrot.slane %v2635, 1
    %v2637 = vadd.f32 %v2635, %v2636
    %s2638 = vtos %v2637
    %v2639 = vrcp.pop 12.0
    %v2640 = vmul.f32 12.0, %v2639
    %v2641 = vsub.f32 1.0, %v2640
    %v2642 = vmul.f32 %v2639, %v2641
    %v2643 = vadd.f32 %v2639, %v2642
    %vm2644 = vweird.f32 %v2639
    %v2645 = vsel %vm2644, %v2639, %v2643
    %s2646 = vtos %v2645
    %s2647 = smul.f32 %s2638, %s2646
    %v2648 = vstv %s2647
    %v2649 = vsub.f32 %v2624, %v2648
    %2651 = vrot.lane.b32.xlu0 %v2649, 127
    %v2652 = vpop.permute.xlu0 %2651
    %2654 = vst.msk [vmem:[#allocation13] sm:$0x3] %vm2628, %v2652
    // Predicated region
    $region118: #{tpu_custom_call.1} parent=1 // pred_check
      _
    $region119: #{tpu_custom_call.1} parent=1 // pred_check_branch
      %2656 = sbr.rel (0) target = $region121
    $region120: #{tpu_custom_call.1} parent=1 // pred_region
      %2658 = vsyncadd [#allocation4], 0
      %s2660 = sshll.u32 [#allocation13], 4
      %s2661 = int_to_ptr.vmem [resolvable:$true] %s2660
      %s2662 = sshll.u32 %s23, 4
      %s2663 = int_to_ptr.hbm [resolvable:$true] %s2662
      %2665 = dma.vmem_to_hbm [thread:$0]  %s2661, 32, %s2663, [#allocation4]
    $region121: #{tpu_custom_call.1} parent=1 // pred_fallthru
      _
    // Predicated region
    $region122: #{tpu_custom_call.1} parent=1 // pred_check
      _
    $region123: #{tpu_custom_call.1} parent=1 // pred_check_branch
      %2667 = sbr.rel (0) target = $region125
    $region124: #{tpu_custom_call.1} parent=1 // pred_region
      %2669 = dma.done [#allocation4], 32
    $region125: #{tpu_custom_call.1} parent=1 // pred_fallthru
      _
    %2670 = vsyncpa [#allocation3], 1
    %2671 = vsyncpa [#allocation7], 1
    %2672 = vsyncpa [#allocation10], 1
    %2673 = vsyncpa [#allocation4], 1
    %2674 = vsyncpa [#allocation5], 1

</llo_original>
